<compile_context>
chip_gen: v7x
topology: tpu7x:2x2x1
jax: 0.10.0
libtpu: 0.0.40
codegen_flags: <defaults>
</compile_context>

<pallas_src>
import functools

import jax
import jax.numpy as jnp
from jax import lax
from jax.experimental import pallas as pl
from jax.experimental.pallas import tpu as pltpu


def _semseg_kernel(w_sref, x_ref, o_ref, *, stride):
    """Fused 1x1-conv + nearest-neighbour upsample for one (image, H-tile).

    w_sref: SMEM (C, K) f32 decoder weight (scalar-prefetched).
    x_ref:  VMEM (1, C, Ht, W)  input activations (NCHW slab).
    o_ref:  VMEM (1, K, Ht*stride, W*stride) output logits (NCHW slab).
    """
    _, C, Ht, W = x_ref.shape
    _, K, Hts, Ws = o_ref.shape

    # --- 1x1 conv == per-pixel channel contraction, done as C*K VPU FMAs
    # with scalar weights from SMEM.  W stays on the dense lane axis.
    accs = [None] * K
    for c in range(C):
        xc = x_ref[0, c].astype(jnp.float32)            # (Ht, W), lane-dense
        for k in range(K):
            t = w_sref[c, k] * xc
            accs[k] = t if accs[k] is None else accs[k] + t

    # --- Nearest upsample by `stride` via 0/1 replication matmuls.
    # U: (W, Ws)   with U[w, wo] = 1  iff  wo in [w*stride, (w+1)*stride)
    wo = lax.broadcasted_iota(jnp.int32, (W, Ws), 1)
    wi = lax.broadcasted_iota(jnp.int32, (W, Ws), 0) * stride
    U = ((wo >= wi) & (wo < wi + stride)).astype(jnp.float32)
    # V: (Hts, Ht) with V[ho, h] = 1  iff  ho in [h*stride, (h+1)*stride)
    ho = lax.broadcasted_iota(jnp.int32, (Hts, Ht), 0)
    hi = lax.broadcasted_iota(jnp.int32, (Hts, Ht), 1) * stride
    V = ((ho >= hi) & (ho < hi + stride)).astype(jnp.float32)

    for k in range(K):
        up_w = jnp.dot(accs[k], U, preferred_element_type=jnp.float32)  # (Ht, Ws)
        up = jnp.dot(V, up_w, preferred_element_type=jnp.float32)       # (Hts, Ws)
        o_ref[0, k] = up.astype(o_ref.dtype)


def _choose_h_tile(H, C, W, K, stride, itemsize=4, budget_bytes=8 << 20):
    """Largest H tile whose double-buffered in+out blocks fit a conservative
    VMEM budget (kept well under v7x's 64 MiB as well as v5e/v6e)."""
    def blocks_bytes(ht):
        in_b = C * ht * W
        out_b = K * (ht * stride) * (W * stride)
        return 2 * itemsize * (in_b + out_b)            # double-buffered
    if blocks_bytes(H) <= budget_bytes:
        return H                                        # whole image per step
    for ht in range(H - (H % 8), 0, -8):                # multiples of 8 only
        if ht > 0 and H % ht == 0 and blocks_bytes(ht) <= budget_bytes:
            return ht
    return H                                            # fallback: full H


def pixel_heads_forward(x_nchw, decoder_w, *, stride):
    """PixelHeads.forward with one SemSegHead, no targets -> empty losses.

    x_nchw:    (N, C_in, H, W) activations, PyTorch NCHW layout.
    decoder_w: (C_in, num_classes) -- Conv2d(C_in, K, 1, bias=False) weight,
               transposed/squeezed from PyTorch's (K, C_in, 1, 1).
    Returns (outputs, losses); outputs['semseg'] has shape
    (N, num_classes, H*stride, W*stride) in NCHW, matching
    F.interpolate(decoder(x), scale_factor=stride) (nearest).
    """
    N, C, H, W = x_nchw.shape
    K = decoder_w.shape[1]
    Ht = _choose_h_tile(H, C, W, K, stride, itemsize=x_nchw.dtype.itemsize)

    kernel = functools.partial(_semseg_kernel, stride=stride)
    semseg = pl.pallas_call(
        kernel,
        out_shape=jax.ShapeDtypeStruct(
            (N, K, H * stride, W * stride), x_nchw.dtype),
        grid_spec=pltpu.PrefetchScalarGridSpec(
            num_scalar_prefetch=1,                      # decoder weight -> SMEM
            grid=(N, H // Ht),
            in_specs=[
                pl.BlockSpec((1, C, Ht, W), lambda n, h, w_s: (n, 0, h, 0)),
            ],
            out_specs=pl.BlockSpec(
                (1, K, Ht * stride, W * stride),
                lambda n, h, w_s: (n, 0, h, 0)),
        ),
        compiler_params=pltpu.CompilerParams(
            dimension_semantics=("parallel", "parallel")),
    )(decoder_w.astype(jnp.float32), x_nchw)

    outputs = {"semseg": semseg}
    losses = {}  # no targets supplied -> SemSegHead contributes no loss
    # TODO(synk): cross-entropy loss branch (targets given) not implemented.
    return outputs, losses


if __name__ == "__main__":
    # Small shapes consistent with the module's forward:
    #   batch=2, channels_in=4 (BACKBONE3D.CHANNELS[0]), spatial=16x16,
    #   num_classes=8, stride=2.
    N, C_in, H, W = 2, 4, 16, 16
    NUM_CLASSES = 8
    STRIDE = 2

    key = jax.random.PRNGKey(0)
    kx, kw = jax.random.split(key)
    x = jax.random.normal(kx, (N, C_in, H, W), dtype=jnp.float32)

    # PyTorch stores the Conv2d(C_in, K, 1, bias=False) weight as
    # (K, C_in, 1, 1); we keep the matmul-ready transposed form (C_in, K).
    w_pt = jax.random.normal(kw, (NUM_CLASSES, C_in, 1, 1), dtype=jnp.float32) * 0.1
    decoder_w = jnp.transpose(w_pt[:, :, 0, 0], (1, 0))    # (C_in, num_classes)

    outputs, losses = pixel_heads_forward(x, decoder_w, stride=STRIDE)
    semseg = jax.block_until_ready(outputs["semseg"])

    # Sanity check against a plain-JAX reference of the same forward pass.
    ref_logits = jnp.einsum("nchw,ck->nkhw", x, decoder_w)
    ref = jnp.repeat(jnp.repeat(ref_logits, STRIDE, axis=2), STRIDE, axis=3)
    assert semseg.shape == (N, NUM_CLASSES, H * STRIDE, W * STRIDE)
    assert jnp.allclose(semseg, ref, atol=1e-5, rtol=1e-5)
    assert losses == {}

    print("KERNEL_OK")
</pallas_src>

<mosaic_0001>
module attributes {stable_mosaic.version = 11 : i64} {
  func.func @_semseg_kernel(%arg0: i32, %arg1: i32, %arg2: memref<4x8xf32, #tpu.memory_space<smem>>, %arg3: memref<1x4x16x16xf32, #tpu.memory_space<vmem>>, %arg4: memref<1x8x32x32xf32, #tpu.memory_space<vmem>>) attributes {dimension_semantics = [#tpu.dimension_semantics<parallel>, #tpu.dimension_semantics<parallel>], iteration_bounds = array<i64: 2, 1>, scalar_prefetch = 1 : i64, scratch_operands = 0 : i64, tpu.core_type = #tpu.core_type<tc>, window_params = [{transform_indices = @transform_0, window_bounds = array<i64: 1, 4, 16, 16>}, {transform_indices = @transform_1, window_bounds = array<i64: 1, 8, 32, 32>}]} {
    %c0 = arith.constant 0 : index
    %c0_0 = arith.constant 0 : index
    %c0_1 = arith.constant 0 : index
    %c0_2 = arith.constant 0 : index
    %0 = vector.load %arg3[%c0, %c0_0, %c0_1, %c0_2] : memref<1x4x16x16xf32, #tpu.memory_space<vmem>>, vector<1x1x16x16xf32>
    %1 = vector.shape_cast %0 : vector<1x1x16x16xf32> to vector<16x16xf32>
    %c0_3 = arith.constant 0 : index
    %c0_4 = arith.constant 0 : index
    %2 = memref.load %arg2[%c0_3, %c0_4] : memref<4x8xf32, #tpu.memory_space<smem>>
    %3 = vector.broadcast %2 : f32 to vector<16x16xf32>
    %4 = arith.mulf %3, %1 : vector<16x16xf32>
    %c0_5 = arith.constant 0 : index
    %c1 = arith.constant 1 : index
    %5 = memref.load %arg2[%c0_5, %c1] : memref<4x8xf32, #tpu.memory_space<smem>>
    %6 = vector.broadcast %5 : f32 to vector<16x16xf32>
    %7 = arith.mulf %6, %1 : vector<16x16xf32>
    %c0_6 = arith.constant 0 : index
    %c2 = arith.constant 2 : index
    %8 = memref.load %arg2[%c0_6, %c2] : memref<4x8xf32, #tpu.memory_space<smem>>
    %9 = vector.broadcast %8 : f32 to vector<16x16xf32>
    %10 = arith.mulf %9, %1 : vector<16x16xf32>
    %c0_7 = arith.constant 0 : index
    %c3 = arith.constant 3 : index
    %11 = memref.load %arg2[%c0_7, %c3] : memref<4x8xf32, #tpu.memory_space<smem>>
    %12 = vector.broadcast %11 : f32 to vector<16x16xf32>
    %13 = arith.mulf %12, %1 : vector<16x16xf32>
    %c0_8 = arith.constant 0 : index
    %c4 = arith.constant 4 : index
    %14 = memref.load %arg2[%c0_8, %c4] : memref<4x8xf32, #tpu.memory_space<smem>>
    %15 = vector.broadcast %14 : f32 to vector<16x16xf32>
    %16 = arith.mulf %15, %1 : vector<16x16xf32>
    %c0_9 = arith.constant 0 : index
    %c5 = arith.constant 5 : index
    %17 = memref.load %arg2[%c0_9, %c5] : memref<4x8xf32, #tpu.memory_space<smem>>
    %18 = vector.broadcast %17 : f32 to vector<16x16xf32>
    %19 = arith.mulf %18, %1 : vector<16x16xf32>
    %c0_10 = arith.constant 0 : index
    %c6 = arith.constant 6 : index
    %20 = memref.load %arg2[%c0_10, %c6] : memref<4x8xf32, #tpu.memory_space<smem>>
    %21 = vector.broadcast %20 : f32 to vector<16x16xf32>
    %22 = arith.mulf %21, %1 : vector<16x16xf32>
    %c0_11 = arith.constant 0 : index
    %c7 = arith.constant 7 : index
    %23 = memref.load %arg2[%c0_11, %c7] : memref<4x8xf32, #tpu.memory_space<smem>>
    %24 = vector.broadcast %23 : f32 to vector<16x16xf32>
    %25 = arith.mulf %24, %1 : vector<16x16xf32>
    %c0_12 = arith.constant 0 : index
    %c1_13 = arith.constant 1 : index
    %c0_14 = arith.constant 0 : index
    %c0_15 = arith.constant 0 : index
    %26 = vector.load %arg3[%c0_12, %c1_13, %c0_14, %c0_15] : memref<1x4x16x16xf32, #tpu.memory_space<vmem>>, vector<1x1x16x16xf32>
    %27 = vector.shape_cast %26 : vector<1x1x16x16xf32> to vector<16x16xf32>
    %c1_16 = arith.constant 1 : index
    %c0_17 = arith.constant 0 : index
    %28 = memref.load %arg2[%c1_16, %c0_17] : memref<4x8xf32, #tpu.memory_space<smem>>
    %29 = vector.broadcast %28 : f32 to vector<16x16xf32>
    %30 = arith.mulf %29, %27 : vector<16x16xf32>
    %31 = arith.addf %4, %30 : vector<16x16xf32>
    %c1_18 = arith.constant 1 : index
    %c1_19 = arith.constant 1 : index
    %32 = memref.load %arg2[%c1_18, %c1_19] : memref<4x8xf32, #tpu.memory_space<smem>>
    %33 = vector.broadcast %32 : f32 to vector<16x16xf32>
    %34 = arith.mulf %33, %27 : vector<16x16xf32>
    %35 = arith.addf %7, %34 : vector<16x16xf32>
    %c1_20 = arith.constant 1 : index
    %c2_21 = arith.constant 2 : index
    %36 = memref.load %arg2[%c1_20, %c2_21] : memref<4x8xf32, #tpu.memory_space<smem>>
    %37 = vector.broadcast %36 : f32 to vector<16x16xf32>
    %38 = arith.mulf %37, %27 : vector<16x16xf32>
    %39 = arith.addf %10, %38 : vector<16x16xf32>
    %c1_22 = arith.constant 1 : index
    %c3_23 = arith.constant 3 : index
    %40 = memref.load %arg2[%c1_22, %c3_23] : memref<4x8xf32, #tpu.memory_space<smem>>
    %41 = vector.broadcast %40 : f32 to vector<16x16xf32>
    %42 = arith.mulf %41, %27 : vector<16x16xf32>
    %43 = arith.addf %13, %42 : vector<16x16xf32>
    %c1_24 = arith.constant 1 : index
    %c4_25 = arith.constant 4 : index
    %44 = memref.load %arg2[%c1_24, %c4_25] : memref<4x8xf32, #tpu.memory_space<smem>>
    %45 = vector.broadcast %44 : f32 to vector<16x16xf32>
    %46 = arith.mulf %45, %27 : vector<16x16xf32>
    %47 = arith.addf %16, %46 : vector<16x16xf32>
    %c1_26 = arith.constant 1 : index
    %c5_27 = arith.constant 5 : index
    %48 = memref.load %arg2[%c1_26, %c5_27] : memref<4x8xf32, #tpu.memory_space<smem>>
    %49 = vector.broadcast %48 : f32 to vector<16x16xf32>
    %50 = arith.mulf %49, %27 : vector<16x16xf32>
    %51 = arith.addf %19, %50 : vector<16x16xf32>
    %c1_28 = arith.constant 1 : index
    %c6_29 = arith.constant 6 : index
    %52 = memref.load %arg2[%c1_28, %c6_29] : memref<4x8xf32, #tpu.memory_space<smem>>
    %53 = vector.broadcast %52 : f32 to vector<16x16xf32>
    %54 = arith.mulf %53, %27 : vector<16x16xf32>
    %55 = arith.addf %22, %54 : vector<16x16xf32>
    %c1_30 = arith.constant 1 : index
    %c7_31 = arith.constant 7 : index
    %56 = memref.load %arg2[%c1_30, %c7_31] : memref<4x8xf32, #tpu.memory_space<smem>>
    %57 = vector.broadcast %56 : f32 to vector<16x16xf32>
    %58 = arith.mulf %57, %27 : vector<16x16xf32>
    %59 = arith.addf %25, %58 : vector<16x16xf32>
    %c0_32 = arith.constant 0 : index
    %c2_33 = arith.constant 2 : index
    %c0_34 = arith.constant 0 : index
    %c0_35 = arith.constant 0 : index
    %60 = vector.load %arg3[%c0_32, %c2_33, %c0_34, %c0_35] : memref<1x4x16x16xf32, #tpu.memory_space<vmem>>, vector<1x1x16x16xf32>
    %61 = vector.shape_cast %60 : vector<1x1x16x16xf32> to vector<16x16xf32>
    %c2_36 = arith.constant 2 : index
    %c0_37 = arith.constant 0 : index
    %62 = memref.load %arg2[%c2_36, %c0_37] : memref<4x8xf32, #tpu.memory_space<smem>>
    %63 = vector.broadcast %62 : f32 to vector<16x16xf32>
    %64 = arith.mulf %63, %61 : vector<16x16xf32>
    %65 = arith.addf %31, %64 : vector<16x16xf32>
    %c2_38 = arith.constant 2 : index
    %c1_39 = arith.constant 1 : index
    %66 = memref.load %arg2[%c2_38, %c1_39] : memref<4x8xf32, #tpu.memory_space<smem>>
    %67 = vector.broadcast %66 : f32 to vector<16x16xf32>
    %68 = arith.mulf %67, %61 : vector<16x16xf32>
    %69 = arith.addf %35, %68 : vector<16x16xf32>
    %c2_40 = arith.constant 2 : index
    %c2_41 = arith.constant 2 : index
    %70 = memref.load %arg2[%c2_40, %c2_41] : memref<4x8xf32, #tpu.memory_space<smem>>
    %71 = vector.broadcast %70 : f32 to vector<16x16xf32>
    %72 = arith.mulf %71, %61 : vector<16x16xf32>
    %73 = arith.addf %39, %72 : vector<16x16xf32>
    %c2_42 = arith.constant 2 : index
    %c3_43 = arith.constant 3 : index
    %74 = memref.load %arg2[%c2_42, %c3_43] : memref<4x8xf32, #tpu.memory_space<smem>>
    %75 = vector.broadcast %74 : f32 to vector<16x16xf32>
    %76 = arith.mulf %75, %61 : vector<16x16xf32>
    %77 = arith.addf %43, %76 : vector<16x16xf32>
    %c2_44 = arith.constant 2 : index
    %c4_45 = arith.constant 4 : index
    %78 = memref.load %arg2[%c2_44, %c4_45] : memref<4x8xf32, #tpu.memory_space<smem>>
    %79 = vector.broadcast %78 : f32 to vector<16x16xf32>
    %80 = arith.mulf %79, %61 : vector<16x16xf32>
    %81 = arith.addf %47, %80 : vector<16x16xf32>
    %c2_46 = arith.constant 2 : index
    %c5_47 = arith.constant 5 : index
    %82 = memref.load %arg2[%c2_46, %c5_47] : memref<4x8xf32, #tpu.memory_space<smem>>
    %83 = vector.broadcast %82 : f32 to vector<16x16xf32>
    %84 = arith.mulf %83, %61 : vector<16x16xf32>
    %85 = arith.addf %51, %84 : vector<16x16xf32>
    %c2_48 = arith.constant 2 : index
    %c6_49 = arith.constant 6 : index
    %86 = memref.load %arg2[%c2_48, %c6_49] : memref<4x8xf32, #tpu.memory_space<smem>>
    %87 = vector.broadcast %86 : f32 to vector<16x16xf32>
    %88 = arith.mulf %87, %61 : vector<16x16xf32>
    %89 = arith.addf %55, %88 : vector<16x16xf32>
    %c2_50 = arith.constant 2 : index
    %c7_51 = arith.constant 7 : index
    %90 = memref.load %arg2[%c2_50, %c7_51] : memref<4x8xf32, #tpu.memory_space<smem>>
    %91 = vector.broadcast %90 : f32 to vector<16x16xf32>
    %92 = arith.mulf %91, %61 : vector<16x16xf32>
    %93 = arith.addf %59, %92 : vector<16x16xf32>
    %c0_52 = arith.constant 0 : index
    %c3_53 = arith.constant 3 : index
    %c0_54 = arith.constant 0 : index
    %c0_55 = arith.constant 0 : index
    %94 = vector.load %arg3[%c0_52, %c3_53, %c0_54, %c0_55] : memref<1x4x16x16xf32, #tpu.memory_space<vmem>>, vector<1x1x16x16xf32>
    %95 = vector.shape_cast %94 : vector<1x1x16x16xf32> to vector<16x16xf32>
    %c3_56 = arith.constant 3 : index
    %c0_57 = arith.constant 0 : index
    %96 = memref.load %arg2[%c3_56, %c0_57] : memref<4x8xf32, #tpu.memory_space<smem>>
    %97 = vector.broadcast %96 : f32 to vector<16x16xf32>
    %98 = arith.mulf %97, %95 : vector<16x16xf32>
    %99 = arith.addf %65, %98 : vector<16x16xf32>
    %c3_58 = arith.constant 3 : index
    %c1_59 = arith.constant 1 : index
    %100 = memref.load %arg2[%c3_58, %c1_59] : memref<4x8xf32, #tpu.memory_space<smem>>
    %101 = vector.broadcast %100 : f32 to vector<16x16xf32>
    %102 = arith.mulf %101, %95 : vector<16x16xf32>
    %103 = arith.addf %69, %102 : vector<16x16xf32>
    %c3_60 = arith.constant 3 : index
    %c2_61 = arith.constant 2 : index
    %104 = memref.load %arg2[%c3_60, %c2_61] : memref<4x8xf32, #tpu.memory_space<smem>>
    %105 = vector.broadcast %104 : f32 to vector<16x16xf32>
    %106 = arith.mulf %105, %95 : vector<16x16xf32>
    %107 = arith.addf %73, %106 : vector<16x16xf32>
    %c3_62 = arith.constant 3 : index
    %c3_63 = arith.constant 3 : index
    %108 = memref.load %arg2[%c3_62, %c3_63] : memref<4x8xf32, #tpu.memory_space<smem>>
    %109 = vector.broadcast %108 : f32 to vector<16x16xf32>
    %110 = arith.mulf %109, %95 : vector<16x16xf32>
    %111 = arith.addf %77, %110 : vector<16x16xf32>
    %c3_64 = arith.constant 3 : index
    %c4_65 = arith.constant 4 : index
    %112 = memref.load %arg2[%c3_64, %c4_65] : memref<4x8xf32, #tpu.memory_space<smem>>
    %113 = vector.broadcast %112 : f32 to vector<16x16xf32>
    %114 = arith.mulf %113, %95 : vector<16x16xf32>
    %115 = arith.addf %81, %114 : vector<16x16xf32>
    %c3_66 = arith.constant 3 : index
    %c5_67 = arith.constant 5 : index
    %116 = memref.load %arg2[%c3_66, %c5_67] : memref<4x8xf32, #tpu.memory_space<smem>>
    %117 = vector.broadcast %116 : f32 to vector<16x16xf32>
    %118 = arith.mulf %117, %95 : vector<16x16xf32>
    %119 = arith.addf %85, %118 : vector<16x16xf32>
    %c3_68 = arith.constant 3 : index
    %c6_69 = arith.constant 6 : index
    %120 = memref.load %arg2[%c3_68, %c6_69] : memref<4x8xf32, #tpu.memory_space<smem>>
    %121 = vector.broadcast %120 : f32 to vector<16x16xf32>
    %122 = arith.mulf %121, %95 : vector<16x16xf32>
    %123 = arith.addf %89, %122 : vector<16x16xf32>
    %c3_70 = arith.constant 3 : index
    %c7_71 = arith.constant 7 : index
    %124 = memref.load %arg2[%c3_70, %c7_71] : memref<4x8xf32, #tpu.memory_space<smem>>
    %125 = vector.broadcast %124 : f32 to vector<16x16xf32>
    %126 = arith.mulf %125, %95 : vector<16x16xf32>
    %127 = arith.addf %93, %126 : vector<16x16xf32>
    %128 = tpu.iota {dimensions = array<i32: 1>} : vector<16x32xi32>
    %129 = tpu.iota {dimensions = array<i32: 0>} : vector<16x32xi32>
    %c2_i32 = arith.constant 2 : i32
    %130 = vector.broadcast %c2_i32 : i32 to vector<16x32xi32>
    %131 = arith.muli %129, %130 : vector<16x32xi32>
    %132 = arith.cmpi sge, %128, %131 : vector<16x32xi32>
    %c2_i32_72 = arith.constant 2 : i32
    %133 = vector.broadcast %c2_i32_72 : i32 to vector<16x32xi32>
    %134 = arith.addi %131, %133 : vector<16x32xi32>
    %135 = arith.cmpi slt, %128, %134 : vector<16x32xi32>
    %136 = arith.andi %132, %135 : vector<16x32xi1>
    %137 = arith.extui %136 : vector<16x32xi1> to vector<16x32xi32>
    %138 = arith.sitofp %137 : vector<16x32xi32> to vector<16x32xf32>
    %139 = tpu.iota {dimensions = array<i32: 0>} : vector<32x16xi32>
    %140 = tpu.iota {dimensions = array<i32: 1>} : vector<32x16xi32>
    %c2_i32_73 = arith.constant 2 : i32
    %141 = vector.broadcast %c2_i32_73 : i32 to vector<32x16xi32>
    %142 = arith.muli %140, %141 : vector<32x16xi32>
    %143 = arith.cmpi sge, %139, %142 : vector<32x16xi32>
    %c2_i32_74 = arith.constant 2 : i32
    %144 = vector.broadcast %c2_i32_74 : i32 to vector<32x16xi32>
    %145 = arith.addi %142, %144 : vector<32x16xi32>
    %146 = arith.cmpi slt, %139, %145 : vector<32x16xi32>
    %147 = arith.andi %143, %146 : vector<32x16xi1>
    %148 = arith.extui %147 : vector<32x16xi1> to vector<32x16xi32>
    %149 = arith.sitofp %148 : vector<32x16xi32> to vector<32x16xf32>
    %cst = arith.constant dense<0.000000e+00> : vector<16x32xf32>
    %150 = tpu.matmul %99, %138, %cst {dimension_numbers = #tpu.dot_dimension_numbers<[1], [0], [0], [1], [0, 0, 1, 1], [], []>} : vector<16x16xf32>, vector<16x32xf32>, vector<16x32xf32> -> vector<16x32xf32>
    %cst_75 = arith.constant dense<0.000000e+00> : vector<32x32xf32>
    %151 = tpu.matmul %149, %150, %cst_75 {dimension_numbers = #tpu.dot_dimension_numbers<[1], [0], [0], [1], [0, 0, 1, 1], [], []>} : vector<32x16xf32>, vector<16x32xf32>, vector<32x32xf32> -> vector<32x32xf32>
    %c0_76 = arith.constant 0 : index
    %c0_77 = arith.constant 0 : index
    %c0_78 = arith.constant 0 : index
    %c0_79 = arith.constant 0 : index
    %152 = vector.load %arg4[%c0_76, %c0_77, %c0_78, %c0_79] : memref<1x8x32x32xf32, #tpu.memory_space<vmem>>, vector<1x1x32x32xf32>
    %153 = vector.shape_cast %152 : vector<1x1x32x32xf32> to vector<32x32xf32>
    %154 = vector.shape_cast %151 : vector<32x32xf32> to vector<1x1x32x32xf32>
    tpu.vector_store %arg4[%c0_76, %c0_77, %c0_78, %c0_79], %154 {strides = array<i32>} : memref<1x8x32x32xf32, #tpu.memory_space<vmem>>, vector<1x1x32x32xf32>,
    %cst_80 = arith.constant dense<0.000000e+00> : vector<16x32xf32>
    %155 = tpu.matmul %103, %138, %cst_80 {dimension_numbers = #tpu.dot_dimension_numbers<[1], [0], [0], [1], [0, 0, 1, 1], [], []>} : vector<16x16xf32>, vector<16x32xf32>, vector<16x32xf32> -> vector<16x32xf32>
    %cst_81 = arith.constant dense<0.000000e+00> : vector<32x32xf32>
    %156 = tpu.matmul %149, %155, %cst_81 {dimension_numbers = #tpu.dot_dimension_numbers<[1], [0], [0], [1], [0, 0, 1, 1], [], []>} : vector<32x16xf32>, vector<16x32xf32>, vector<32x32xf32> -> vector<32x32xf32>
    %c0_82 = arith.constant 0 : index
    %c1_83 = arith.constant 1 : index
    %c0_84 = arith.constant 0 : index
    %c0_85 = arith.constant 0 : index
    %157 = vector.load %arg4[%c0_82, %c1_83, %c0_84, %c0_85] : memref<1x8x32x32xf32, #tpu.memory_space<vmem>>, vector<1x1x32x32xf32>
    %158 = vector.shape_cast %157 : vector<1x1x32x32xf32> to vector<32x32xf32>
    %159 = vector.shape_cast %156 : vector<32x32xf32> to vector<1x1x32x32xf32>
    tpu.vector_store %arg4[%c0_82, %c1_83, %c0_84, %c0_85], %159 {strides = array<i32>} : memref<1x8x32x32xf32, #tpu.memory_space<vmem>>, vector<1x1x32x32xf32>,
    %cst_86 = arith.constant dense<0.000000e+00> : vector<16x32xf32>
    %160 = tpu.matmul %107, %138, %cst_86 {dimension_numbers = #tpu.dot_dimension_numbers<[1], [0], [0], [1], [0, 0, 1, 1], [], []>} : vector<16x16xf32>, vector<16x32xf32>, vector<16x32xf32> -> vector<16x32xf32>
    %cst_87 = arith.constant dense<0.000000e+00> : vector<32x32xf32>
    %161 = tpu.matmul %149, %160, %cst_87 {dimension_numbers = #tpu.dot_dimension_numbers<[1], [0], [0], [1], [0, 0, 1, 1], [], []>} : vector<32x16xf32>, vector<16x32xf32>, vector<32x32xf32> -> vector<32x32xf32>
    %c0_88 = arith.constant 0 : index
    %c2_89 = arith.constant 2 : index
    %c0_90 = arith.constant 0 : index
    %c0_91 = arith.constant 0 : index
    %162 = vector.load %arg4[%c0_88, %c2_89, %c0_90, %c0_91] : memref<1x8x32x32xf32, #tpu.memory_space<vmem>>, vector<1x1x32x32xf32>
    %163 = vector.shape_cast %162 : vector<1x1x32x32xf32> to vector<32x32xf32>
    %164 = vector.shape_cast %161 : vector<32x32xf32> to vector<1x1x32x32xf32>
    tpu.vector_store %arg4[%c0_88, %c2_89, %c0_90, %c0_91], %164 {strides = array<i32>} : memref<1x8x32x32xf32, #tpu.memory_space<vmem>>, vector<1x1x32x32xf32>,
    %cst_92 = arith.constant dense<0.000000e+00> : vector<16x32xf32>
    %165 = tpu.matmul %111, %138, %cst_92 {dimension_numbers = #tpu.dot_dimension_numbers<[1], [0], [0], [1], [0, 0, 1, 1], [], []>} : vector<16x16xf32>, vector<16x32xf32>, vector<16x32xf32> -> vector<16x32xf32>
    %cst_93 = arith.constant dense<0.000000e+00> : vector<32x32xf32>
    %166 = tpu.matmul %149, %165, %cst_93 {dimension_numbers = #tpu.dot_dimension_numbers<[1], [0], [0], [1], [0, 0, 1, 1], [], []>} : vector<32x16xf32>, vector<16x32xf32>, vector<32x32xf32> -> vector<32x32xf32>
    %c0_94 = arith.constant 0 : index
    %c3_95 = arith.constant 3 : index
    %c0_96 = arith.constant 0 : index
    %c0_97 = arith.constant 0 : index
    %167 = vector.load %arg4[%c0_94, %c3_95, %c0_96, %c0_97] : memref<1x8x32x32xf32, #tpu.memory_space<vmem>>, vector<1x1x32x32xf32>
    %168 = vector.shape_cast %167 : vector<1x1x32x32xf32> to vector<32x32xf32>
    %169 = vector.shape_cast %166 : vector<32x32xf32> to vector<1x1x32x32xf32>
    tpu.vector_store %arg4[%c0_94, %c3_95, %c0_96, %c0_97], %169 {strides = array<i32>} : memref<1x8x32x32xf32, #tpu.memory_space<vmem>>, vector<1x1x32x32xf32>,
    %cst_98 = arith.constant dense<0.000000e+00> : vector<16x32xf32>
    %170 = tpu.matmul %115, %138, %cst_98 {dimension_numbers = #tpu.dot_dimension_numbers<[1], [0], [0], [1], [0, 0, 1, 1], [], []>} : vector<16x16xf32>, vector<16x32xf32>, vector<16x32xf32> -> vector<16x32xf32>
    %cst_99 = arith.constant dense<0.000000e+00> : vector<32x32xf32>
    %171 = tpu.matmul %149, %170, %cst_99 {dimension_numbers = #tpu.dot_dimension_numbers<[1], [0], [0], [1], [0, 0, 1, 1], [], []>} : vector<32x16xf32>, vector<16x32xf32>, vector<32x32xf32> -> vector<32x32xf32>
    %c0_100 = arith.constant 0 : index
    %c4_101 = arith.constant 4 : index
    %c0_102 = arith.constant 0 : index
    %c0_103 = arith.constant 0 : index
    %172 = vector.load %arg4[%c0_100, %c4_101, %c0_102, %c0_103] : memref<1x8x32x32xf32, #tpu.memory_space<vmem>>, vector<1x1x32x32xf32>
    %173 = vector.shape_cast %172 : vector<1x1x32x32xf32> to vector<32x32xf32>
    %174 = vector.shape_cast %171 : vector<32x32xf32> to vector<1x1x32x32xf32>
    tpu.vector_store %arg4[%c0_100, %c4_101, %c0_102, %c0_103], %174 {strides = array<i32>} : memref<1x8x32x32xf32, #tpu.memory_space<vmem>>, vector<1x1x32x32xf32>,
    %cst_104 = arith.constant dense<0.000000e+00> : vector<16x32xf32>
    %175 = tpu.matmul %119, %138, %cst_104 {dimension_numbers = #tpu.dot_dimension_numbers<[1], [0], [0], [1], [0, 0, 1, 1], [], []>} : vector<16x16xf32>, vector<16x32xf32>, vector<16x32xf32> -> vector<16x32xf32>
    %cst_105 = arith.constant dense<0.000000e+00> : vector<32x32xf32>
    %176 = tpu.matmul %149, %175, %cst_105 {dimension_numbers = #tpu.dot_dimension_numbers<[1], [0], [0], [1], [0, 0, 1, 1], [], []>} : vector<32x16xf32>, vector<16x32xf32>, vector<32x32xf32> -> vector<32x32xf32>
    %c0_106 = arith.constant 0 : index
    %c5_107 = arith.constant 5 : index
    %c0_108 = arith.constant 0 : index
    %c0_109 = arith.constant 0 : index
    %177 = vector.load %arg4[%c0_106, %c5_107, %c0_108, %c0_109] : memref<1x8x32x32xf32, #tpu.memory_space<vmem>>, vector<1x1x32x32xf32>
    %178 = vector.shape_cast %177 : vector<1x1x32x32xf32> to vector<32x32xf32>
    %179 = vector.shape_cast %176 : vector<32x32xf32> to vector<1x1x32x32xf32>
    tpu.vector_store %arg4[%c0_106, %c5_107, %c0_108, %c0_109], %179 {strides = array<i32>} : memref<1x8x32x32xf32, #tpu.memory_space<vmem>>, vector<1x1x32x32xf32>,
    %cst_110 = arith.constant dense<0.000000e+00> : vector<16x32xf32>
    %180 = tpu.matmul %123, %138, %cst_110 {dimension_numbers = #tpu.dot_dimension_numbers<[1], [0], [0], [1], [0, 0, 1, 1], [], []>} : vector<16x16xf32>, vector<16x32xf32>, vector<16x32xf32> -> vector<16x32xf32>
    %cst_111 = arith.constant dense<0.000000e+00> : vector<32x32xf32>
    %181 = tpu.matmul %149, %180, %cst_111 {dimension_numbers = #tpu.dot_dimension_numbers<[1], [0], [0], [1], [0, 0, 1, 1], [], []>} : vector<32x16xf32>, vector<16x32xf32>, vector<32x32xf32> -> vector<32x32xf32>
    %c0_112 = arith.constant 0 : index
    %c6_113 = arith.constant 6 : index
    %c0_114 = arith.constant 0 : index
    %c0_115 = arith.constant 0 : index
    %182 = vector.load %arg4[%c0_112, %c6_113, %c0_114, %c0_115] : memref<1x8x32x32xf32, #tpu.memory_space<vmem>>, vector<1x1x32x32xf32>
    %183 = vector.shape_cast %182 : vector<1x1x32x32xf32> to vector<32x32xf32>
    %184 = vector.shape_cast %181 : vector<32x32xf32> to vector<1x1x32x32xf32>
    tpu.vector_store %arg4[%c0_112, %c6_113, %c0_114, %c0_115], %184 {strides = array<i32>} : memref<1x8x32x32xf32, #tpu.memory_space<vmem>>, vector<1x1x32x32xf32>,
    %cst_116 = arith.constant dense<0.000000e+00> : vector<16x32xf32>
    %185 = tpu.matmul %127, %138, %cst_116 {dimension_numbers = #tpu.dot_dimension_numbers<[1], [0], [0], [1], [0, 0, 1, 1], [], []>} : vector<16x16xf32>, vector<16x32xf32>, vector<16x32xf32> -> vector<16x32xf32>
    %cst_117 = arith.constant dense<0.000000e+00> : vector<32x32xf32>
    %186 = tpu.matmul %149, %185, %cst_117 {dimension_numbers = #tpu.dot_dimension_numbers<[1], [0], [0], [1], [0, 0, 1, 1], [], []>} : vector<32x16xf32>, vector<16x32xf32>, vector<32x32xf32> -> vector<32x32xf32>
    %c0_118 = arith.constant 0 : index
    %c7_119 = arith.constant 7 : index
    %c0_120 = arith.constant 0 : index
    %c0_121 = arith.constant 0 : index
    %187 = vector.load %arg4[%c0_118, %c7_119, %c0_120, %c0_121] : memref<1x8x32x32xf32, #tpu.memory_space<vmem>>, vector<1x1x32x32xf32>
    %188 = vector.shape_cast %187 : vector<1x1x32x32xf32> to vector<32x32xf32>
    %189 = vector.shape_cast %186 : vector<32x32xf32> to vector<1x1x32x32xf32>
    tpu.vector_store %arg4[%c0_118, %c7_119, %c0_120, %c0_121], %189 {strides = array<i32>} : memref<1x8x32x32xf32, #tpu.memory_space<vmem>>, vector<1x1x32x32xf32>,
    return
  }
  func.func @transform_0(%arg0: i32, %arg1: i32, %arg2: memref<4x8xf32, #tpu.memory_space<smem>>) -> (i32, i32, i32, i32) {
    %c0_i32 = arith.constant 0 : i32
    %c0_i32_0 = arith.constant 0 : i32
    %c0_i32_1 = arith.constant 0 : i32
    return %arg0, %c0_i32, %arg1, %c0_i32_0 : i32, i32, i32, i32
  }
  func.func @transform_1(%arg0: i32, %arg1: i32, %arg2: memref<4x8xf32, #tpu.memory_space<smem>>) -> (i32, i32, i32, i32) {
    %c0_i32 = arith.constant 0 : i32
    %c0_i32_0 = arith.constant 0 : i32
    %c0_i32_1 = arith.constant 0 : i32
    return %arg0, %c0_i32, %arg1, %c0_i32_0 : i32, i32, i32, i32
  }
}

</mosaic_0001>

<llo_original>
// kernel: tpu_custom_call.1
$region0: #{tpu_custom_call.1}
  #allocation0 [shape = 'u32[]', space=smem, size = 0x4, offset = 0x4, fixed_abs, tag = 'smem constant byte address 0x4 - core index']
  #allocation1 [shape = 'u32[144,128]{1,0:T(1,128)}', space=vmem, size = 0x12000, scoped, tag = 'internal scratch']
  #allocation2 [shape = 's32[1]{0}', space=sflag, size = 0x4, scoped, tag = 'scoped memory for tpu_custom_call.1']
  #allocation3 [shape = 'u8[2048]{0}', space=smem, size = 0x800, scoped, tag = 'prefetched SMEM operand 0']
  %s0 = inlined_call_operand.hbm [shape: f32[4,8], index: 0, kind: input, shape index: {}]
  %s1 = inlined_call_operand.hbm [shape: f32[2,4,16,16], index: 1, kind: input, shape index: {}]
  %s2 = inlined_call_operand.hbm [shape: f32[2,8,32,32], index: 2, kind: output, shape index: {}]
  %s3 = sld [smem:[#allocation0]]
  $region41: #{tpu_custom_call.1} parent=0
    _
  %s5 = ssub.s32 1, %s3
  %s6 = scalar_select 0, %s5, %s3
  %8 = dma.hbm_to_smem %s0, 64, [#allocation3], [#allocation2]
  %9 = dma.done [#allocation2], 64
  %10 = sfence
  $region1: #{tpu_custom_call.1} parent=0
    #allocation4 [shape = 'u8[65536]{0}', space=vmem, size = 0x10000, scoped, tag = 'input window, operand 1']
    #allocation5 [shape = 's32[2]{0}', space=sflag, size = 0x8, scoped, tag = 'scoped memory for tpu_custom_call.1']
    #allocation6 [shape = 's32[2]{0}', space=sflag, size = 0x8, scoped, tag = 'scoped memory for tpu_custom_call.1']
    #allocation7 [shape = 'u8[262144]{0}', space=vmem, size = 0x40000, scoped, tag = 'output window, operand 0']
    %11 = vsyncpa [#allocation5], 0
    %s12 = scalar_lea.sflag [#allocation5], 1
    %13 = vsyncpa %s12, 0
    %14 = vsyncpa [#allocation6], 0
    %s15 = scalar_lea.sflag [#allocation6], 1
    %16 = vsyncpa %s15, 0
    loop: start=0, step=1, limit=4
    $region2: #{tpu_custom_call.1} parent=1 // loop_pre_header
      _
    $region3: #{tpu_custom_call.1} parent=1 // loop_header
      %s18 = sphi 0, %s22
      %p19 = scmp.ge.s32.totalorder %s18, 4
      %s25 = sphi 0, %s37
      %s26 = sphi 0, %s33
      %s27 = sphi 0, %s25
      %s28 = sphi 0, %s26
      %s29 = sphi 0, %s27
      %s30 = sphi 0, %s28
      %s42 = sphi 0, %s44
      %s45 = sphi 0, %s42
      %s46 = sphi 0, %s45
      %s62 = sphi 0, %s46
      %s70 = sphi 0, %s72
      %s73 = sphi 0, %s70
      %s74 = sphi 0, %s73
      %s90 = sphi 0, %s74
    $region4: #{tpu_custom_call.1} parent=1 // loop_header_branch
      %21 = sbr.rel (%p19) target = $region8
    $region5: #{tpu_custom_call.1} parent=1 // loop_body
      %s23 = ssub.s32 %s18, 1
      %s24 = ssub.s32 %s18, 2
      %s31 = sadd.s32 1, %s26
      %p32 = scmp.ge.s32.totalorder %s31, 1
      %s33 = scalar_select %p32, 0, %s31
      %s34 = sadd.s32 1, %s25
      %s35 = scalar_select %p32, %s34, %s25
      %p36 = scmp.ge.s32.totalorder %s35, 2
      %s37 = scalar_select %p36, 0, %s35
      %s38 = ssub.s32 %s25, %s37
      %s39 = ssub.s32 %s26, %s33
      %s40 = sor.u32 %s38, %s39
      %p41 = scmp.eq.s32.totalorder %s40, 0
      %s43 = sadd.s32 %s42, 1
      %s44 = scalar_select %p41, %s42, %s43
      %p47 = pneg %p41
      %p48 = scmp.eq.s32.totalorder %s18, 1
      %p49 = por %p47, %p48
      %p50 = scmp.ne.s32.totalorder %s42, %s45
      %p51 = scmp.eq.s32.totalorder %s18, 0
      %p52 = por %p50, %p51
      %p53 = scmp.ne.s32.totalorder %s42, %s45
      %p54 = scmp.eq.s32.totalorder %s23, 1
      %p55 = por %p53, %p54
      %p56 = scmp.ne.s32.totalorder %s45, %s46
      %p57 = scmp.eq.s32.totalorder %s23, 0
      %p58 = por %p56, %p57
      %p59 = scmp.ne.s32.totalorder %s45, %s46
      %p60 = scmp.eq.s32.totalorder %s24, 1
      %p61 = por %p59, %p60
      %p63 = scmp.ne.s32.totalorder %s46, %s62
      %p64 = scmp.eq.s32.totalorder %s24, 0
      %p65 = por %p63, %p64
      %s66 = ssub.s32 %s25, %s37
      %s67 = ssub.s32 %s26, %s33
      %s68 = sor.u32 %s66, %s67
      %p69 = scmp.eq.s32.totalorder %s68, 0
      %s71 = sadd.s32 %s70, 1
      %s72 = scalar_select %p69, %s70, %s71
      %p75 = pneg %p69
      %p76 = scmp.eq.s32.totalorder %s18, 1
      %p77 = por %p75, %p76
      %p78 = scmp.ne.s32.totalorder %s70, %s73
      %p79 = scmp.eq.s32.totalorder %s18, 0
      %p80 = por %p78, %p79
      %p81 = scmp.ne.s32.totalorder %s70, %s73
      %p82 = scmp.eq.s32.totalorder %s23, 1
      %p83 = por %p81, %p82
      %p84 = scmp.ne.s32.totalorder %s73, %s74
      %p85 = scmp.eq.s32.totalorder %s23, 0
      %p86 = por %p84, %p85
      %p87 = scmp.ne.s32.totalorder %s73, %s74
      %p88 = scmp.eq.s32.totalorder %s24, 1
      %p89 = por %p87, %p88
      %p91 = scmp.ne.s32.totalorder %s74, %s90
      %p92 = scmp.eq.s32.totalorder %s24, 0
      %p93 = por %p91, %p92
      %p94 = scmp.le.s32.totalorder 1, %s18
      %p95 = scmp.lt.s32.totalorder %s18, 3
      %p96 = pnand %p94, %p95
      %p97 = pneg %p96
      // Predicated region
      $region9: #{tpu_custom_call.1} parent=5 // pred_check
        _
      $region10: #{tpu_custom_call.1} parent=5 // pred_check_branch
        %99 = sbr.rel (%p96) target = $region12
      $region11: #{tpu_custom_call.1} parent=5 // pred_region
        %s100 = ssub.s32 %s18, 1
      $region12: #{tpu_custom_call.1} parent=5 // pred_fallthru
        _
      %p101 = scmp.lt.s32.totalorder %s18, 2
      // Predicated region
      $region13: #{tpu_custom_call.1} parent=5 // pred_check
        %p102 = pneg %p101
      $region14: #{tpu_custom_call.1} parent=5 // pred_check_branch
        %104 = sbr.rel (%p102) target = $region16
      $region15: #{tpu_custom_call.1} parent=5 // pred_region
        // Predicated region
        $region17: #{tpu_custom_call.1} parent=15 // pred_check
          %p105 = pneg %p52
        $region18: #{tpu_custom_call.1} parent=15 // pred_check_branch
          %107 = sbr.rel (%p105) target = $region20
        $region19: #{tpu_custom_call.1} parent=15 // pred_region
          %s108 = sand.u32 %s42, 1
          %s109 = scalar_lea.sflag [#allocation5], %s108
          %s110 = sand.u32 %s42, 1
          %s111 = smul.addr %s110, 64
          %s112 = scalar_lea.vmem [#allocation4], %s111
          %s113 = smul.u32 2, %s26
          %s115 = ssub.s32 1024, 1024
          %116 = vsyncadd %s109, %s115
          %s117 = smul.addr %s25, 8
          %s118 = sadd.s32 %s113, %s117
          %s119 = smul.addr %s118, 128
          %s120 = scalar_lea.hbm %s1, %s119
          %s121 = sshll.u32 %s112, 4
          %s122 = int_to_ptr.vmem [resolvable:$true] %s121
          %127 = dma.hbm_to_vmem [thread:$0]  %s120, 1024, %s122, %s109, 128, 128, 8
        $region20: #{tpu_custom_call.1} parent=15 // pred_fallthru
          _
      $region16: #{tpu_custom_call.1} parent=5 // pred_fallthru
        _
      %p128 = scmp.le.s32.totalorder 1, %s18
      %p129 = scmp.lt.s32.totalorder %s18, 3
      %p130 = pnand %p128, %p129
      %p131 = pneg %p130
      // Predicated region
      $region21: #{tpu_custom_call.1} parent=5 // pred_check
        _
      $region22: #{tpu_custom_call.1} parent=5 // pred_check_branch
        %133 = sbr.rel (%p130) target = $region24
      $region23: #{tpu_custom_call.1} parent=5 // pred_region
        %s134 = ssub.s32 %s18, 1
        %s135 = sand.u32 %s45, 1
        %s136 = scalar_lea.sflag [#allocation5], %s135
        %s137 = sand.u32 %s45, 1
        %s138 = smul.addr %s137, 64
        %s139 = scalar_lea.vmem [#allocation4], %s138
        // Predicated region
        $region25: #{tpu_custom_call.1} parent=23 // pred_check
          %p140 = pneg %p58
        $region26: #{tpu_custom_call.1} parent=23 // pred_check_branch
          %142 = sbr.rel (%p140) target = $region28
        $region27: #{tpu_custom_call.1} parent=23 // pred_region
          %143 = dma.done %s136, 1024
        $region28: #{tpu_custom_call.1} parent=23 // pred_fallthru
          _
        %s144 = sand.u32 %s45, 1
        %s145 = scalar_lea.sflag [#allocation5], %s144
        %s146 = sand.u32 %s45, 1
        %s147 = smul.addr %s146, 64
        %s148 = scalar_lea.vmem [#allocation4], %s147
        %p149 = pneg %p58
        %p150 = pneg %p55
        %p151 = pneg %p86
        %p152 = pneg %p83
        %s153 = sand.u32 %s73, 1
        %s154 = scalar_lea.sflag [#allocation6], %s153
        %s155 = sand.u32 %s73, 1
        %s156 = smul.addr %s155, 256
        %s157 = scalar_lea.vmem [#allocation7], %s156
        %s158 = smul.u32 2, %s28
        %s159 = smul.u32 4, %s28
        %v160 = vld [vmem:[%s139] sm:$0xff]
        %v161 = vld [vmem:[%s139 + $0x8] sm:$0xff]
        %s162 = sld [smem:[#allocation3]]
        %v163 = vstv %s162
        %v164 = vmul.f32 %v163, %v160
        %v165 = vmul.f32 %v163, %v161
        %s166 = sld [smem:[#allocation3 + $0x1]]
        %v167 = vstv %s166
        %v168 = vmul.f32 %v167, %v160
        %v169 = vmul.f32 %v167, %v161
        %s170 = sld [smem:[#allocation3 + $0x2]]
        %v171 = vstv %s170
        %v172 = vmul.f32 %v171, %v160
        %v173 = vmul.f32 %v171, %v161
        %s174 = sld [smem:[#allocation3 + $0x3]]
        %v175 = vstv %s174
        %v176 = vmul.f32 %v175, %v160
        %v177 = vmul.f32 %v175, %v161
        %s178 = sld [smem:[#allocation3 + $0x4]]
        %v179 = vstv %s178
        %v180 = vmul.f32 %v179, %v160
        %v181 = vmul.f32 %v179, %v161
        %s182 = sld [smem:[#allocation3 + $0x5]]
        %v183 = vstv %s182
        %v184 = vmul.f32 %v183, %v160
        %v185 = vmul.f32 %v183, %v161
        %s186 = sld [smem:[#allocation3 + $0x6]]
        %v187 = vstv %s186
        %v188 = vmul.f32 %v187, %v160
        %v189 = vmul.f32 %v187, %v161
        %s190 = sld [smem:[#allocation3 + $0x7]]
        %v191 = vstv %s190
        %v192 = vmul.f32 %v191, %v160
        %v193 = vmul.f32 %v191, %v161
        %s194 = scalar_lea.vmem %s139, 16 [#allocation4]
        %v195 = vld [vmem:[%s194] sm:$0xff]
        %v196 = vld [vmem:[%s194 + $0x8] sm:$0xff]
        %s197 = sld [smem:[#allocation3 + $0x80]]
        %v198 = vstv %s197
        %v199 = vmul.f32 %v198, %v195
        %v200 = vmul.f32 %v198, %v196
        %v201 = vadd.f32 %v164, %v199
        %v202 = vadd.f32 %v165, %v200
        %s203 = sld [smem:[#allocation3 + $0x81]]
        %v204 = vstv %s203
        %v205 = vmul.f32 %v204, %v195
        %v206 = vmul.f32 %v204, %v196
        %v207 = vadd.f32 %v168, %v205
        %v208 = vadd.f32 %v169, %v206
        %s209 = sld [smem:[#allocation3 + $0x82]]
        %v210 = vstv %s209
        %v211 = vmul.f32 %v210, %v195
        %v212 = vmul.f32 %v210, %v196
        %v213 = vadd.f32 %v172, %v211
        %v214 = vadd.f32 %v173, %v212
        %s215 = sld [smem:[#allocation3 + $0x83]]
        %v216 = vstv %s215
        %v217 = vmul.f32 %v216, %v195
        %v218 = vmul.f32 %v216, %v196
        %v219 = vadd.f32 %v176, %v217
        %v220 = vadd.f32 %v177, %v218
        %s221 = sld [smem:[#allocation3 + $0x84]]
        %v222 = vstv %s221
        %v223 = vmul.f32 %v222, %v195
        %v224 = vmul.f32 %v222, %v196
        %v225 = vadd.f32 %v180, %v223
        %v226 = vadd.f32 %v181, %v224
        %s227 = sld [smem:[#allocation3 + $0x85]]
        %v228 = vstv %s227
        %v229 = vmul.f32 %v228, %v195
        %v230 = vmul.f32 %v228, %v196
        %v231 = vadd.f32 %v184, %v229
        %v232 = vadd.f32 %v185, %v230
        %s233 = sld [smem:[#allocation3 + $0x86]]
        %v234 = vstv %s233
        %v235 = vmul.f32 %v234, %v195
        %v236 = vmul.f32 %v234, %v196
        %v237 = vadd.f32 %v188, %v235
        %v238 = vadd.f32 %v189, %v236
        %s239 = sld [smem:[#allocation3 + $0x87]]
        %v240 = vstv %s239
        %v241 = vmul.f32 %v240, %v195
        %v242 = vmul.f32 %v240, %v196
        %v243 = vadd.f32 %v192, %v241
        %v244 = vadd.f32 %v193, %v242
        %s245 = scalar_lea.vmem %s139, 32 [#allocation4]
        %v246 = vld [vmem:[%s245] sm:$0xff]
        %v247 = vld [vmem:[%s245 + $0x8] sm:$0xff]
        %s248 = sld [smem:[#allocation3 + $0x100]]
        %v249 = vstv %s248
        %v250 = vmul.f32 %v249, %v246
        %v251 = vmul.f32 %v249, %v247
        %v252 = vadd.f32 %v201, %v250
        %v253 = vadd.f32 %v202, %v251
        %s254 = sld [smem:[#allocation3 + $0x101]]
        %v255 = vstv %s254
        %v256 = vmul.f32 %v255, %v246
        %v257 = vmul.f32 %v255, %v247
        %v258 = vadd.f32 %v207, %v256
        %v259 = vadd.f32 %v208, %v257
        %s260 = sld [smem:[#allocation3 + $0x102]]
        %v261 = vstv %s260
        %v262 = vmul.f32 %v261, %v246
        %v263 = vmul.f32 %v261, %v247
        %v264 = vadd.f32 %v213, %v262
        %v265 = vadd.f32 %v214, %v263
        %s266 = sld [smem:[#allocation3 + $0x103]]
        %v267 = vstv %s266
        %v268 = vmul.f32 %v267, %v246
        %v269 = vmul.f32 %v267, %v247
        %v270 = vadd.f32 %v219, %v268
        %v271 = vadd.f32 %v220, %v269
        %s272 = sld [smem:[#allocation3 + $0x104]]
        %v273 = vstv %s272
        %v274 = vmul.f32 %v273, %v246
        %v275 = vmul.f32 %v273, %v247
        %v276 = vadd.f32 %v225, %v274
        %v277 = vadd.f32 %v226, %v275
        %s278 = sld [smem:[#allocation3 + $0x105]]
        %v279 = vstv %s278
        %v280 = vmul.f32 %v279, %v246
        %v281 = vmul.f32 %v279, %v247
        %v282 = vadd.f32 %v231, %v280
        %v283 = vadd.f32 %v232, %v281
        %s284 = sld [smem:[#allocation3 + $0x106]]
        %v285 = vstv %s284
        %v286 = vmul.f32 %v285, %v246
        %v287 = vmul.f32 %v285, %v247
        %v288 = vadd.f32 %v237, %v286
        %v289 = vadd.f32 %v238, %v287
        %s290 = sld [smem:[#allocation3 + $0x107]]
        %v291 = vstv %s290
        %v292 = vmul.f32 %v291, %v246
        %v293 = vmul.f32 %v291, %v247
        %v294 = vadd.f32 %v243, %v292
        %v295 = vadd.f32 %v244, %v293
        %s296 = scalar_lea.vmem %s139, 48 [#allocation4]
        %v297 = vld [vmem:[%s296] sm:$0xff]
        %v298 = vld [vmem:[%s296 + $0x8] sm:$0xff]
        %s299 = sld [smem:[#allocation3 + $0x180]]
        %v300 = vstv %s299
        %v301 = vmul.f32 %v300, %v297
        %v302 = vmul.f32 %v300, %v298
        %v303 = vadd.f32 %v252, %v301
        %v304 = vadd.f32 %v253, %v302
        %s305 = sld [smem:[#allocation3 + $0x181]]
        %v306 = vstv %s305
        %v307 = vmul.f32 %v306, %v297
        %v308 = vmul.f32 %v306, %v298
        %v309 = vadd.f32 %v258, %v307
        %v310 = vadd.f32 %v259, %v308
        %s311 = sld [smem:[#allocation3 + $0x182]]
        %v312 = vstv %s311
        %v313 = vmul.f32 %v312, %v297
        %v314 = vmul.f32 %v312, %v298
        %v315 = vadd.f32 %v264, %v313
        %v316 = vadd.f32 %v265, %v314
        %s317 = sld [smem:[#allocation3 + $0x183]]
        %v318 = vstv %s317
        %v319 = vmul.f32 %v318, %v297
        %v320 = vmul.f32 %v318, %v298
        %v321 = vadd.f32 %v270, %v319
        %v322 = vadd.f32 %v271, %v320
        %s323 = sld [smem:[#allocation3 + $0x184]]
        %v324 = vstv %s323
        %v325 = vmul.f32 %v324, %v297
        %v326 = vmul.f32 %v324, %v298
        %v327 = vadd.f32 %v276, %v325
        %v328 = vadd.f32 %v277, %v326
        %s329 = sld [smem:[#allocation3 + $0x185]]
        %v330 = vstv %s329
        %v331 = vmul.f32 %v330, %v297
        %v332 = vmul.f32 %v330, %v298
        %v333 = vadd.f32 %v282, %v331
        %v334 = vadd.f32 %v283, %v332
        %s335 = sld [smem:[#allocation3 + $0x186]]
        %v336 = vstv %s335
        %v337 = vmul.f32 %v336, %v297
        %v338 = vmul.f32 %v336, %v298
        %v339 = vadd.f32 %v288, %v337
        %v340 = vadd.f32 %v289, %v338
        %s341 = sld [smem:[#allocation3 + $0x187]]
        %v342 = vstv %s341
        %v343 = vmul.f32 %v342, %v297
        %v344 = vmul.f32 %v342, %v298
        %v345 = vadd.f32 %v294, %v343
        %v346 = vadd.f32 %v295, %v344
        %v347 = vlaneseq
        %v348 = vand.u32 %v347, 127
        %v349 = vlaneseq
        %v350 = vshrl.u32 %v349, 7
        %v351 = vadd.s32 %v350, 8
        %v352 = vmul.u32 %v350, 2
        %v353 = vmul.u32 %v351, 2
        %vm354 = vcmp.ge.s32.totalorder %v348, %v352
        %vm355 = vcmp.ge.s32.totalorder %v348, %v353
        %v356 = vadd.s32 %v352, 2
        %v357 = vadd.s32 %v353, 2
        %vm358 = vcmp.lt.s32.totalorder %v348, %v356
        %vm359 = vcmp.lt.s32.totalorder %v348, %v357
        %vm360 = vmand %vm354, %vm358
        %vm361 = vmand %vm355, %vm359
        %v362 = vsel %vm360, 1, 0
        %v363 = vsel %vm361, 1, 0
        %v364 = vcvt.s32.f32 %v362
        %v365 = vcvt.s32.f32 %v363
        %v366 = vadd.s32 %v350, 16
        %v367 = vadd.s32 %v350, 24
        %v368 = vmul.u32 %v348, 2
        %vm369 = vcmp.ge.s32.totalorder %v350, %v368
        %vm370 = vcmp.ge.s32.totalorder %v351, %v368
        %vm371 = vcmp.ge.s32.totalorder %v366, %v368
        %vm372 = vcmp.ge.s32.totalorder %v367, %v368
        %v373 = vadd.s32 %v368, 2
        %vm374 = vcmp.lt.s32.totalorder %v350, %v373
        %vm375 = vcmp.lt.s32.totalorder %v351, %v373
        %vm376 = vcmp.lt.s32.totalorder %v366, %v373
        %vm377 = vcmp.lt.s32.totalorder %v367, %v373
        %vm378 = vmand %vm369, %vm374
        %vm379 = vmand %vm370, %vm375
        %vm380 = vmand %vm371, %vm376
        %vm381 = vmand %vm372, %vm377
        %v382 = vsel %vm378, 1, 0
        %v383 = vsel %vm379, 1, 0
        %v384 = vsel %vm380, 1, 0
        %v385 = vsel %vm381, 1, 0
        %v386 = vcvt.s32.f32 %v382
        %v387 = vcvt.s32.f32 %v383
        %v388 = vcvt.s32.f32 %v384
        %v389 = vcvt.s32.f32 %v385
        %vm390 = vcmask 130048
        %v392 = vsel %vm390, %v303, 0
        %v395 = vsel %vm390, %v304, 0
        %397 = vmatprep.subr.mxu0 0.0
        %398 = vmatpush1.msra.mxu0 %v364
        %399 = vmatprep.subr.mxu0 0.0
        %400 = vmatpush1.msra.mxu0 %v365
        %401 = vmatprep.subr.mxu0 0.0
        %402 = vmatpush1.msra.mxu0 0.0
        %403 = vmatprep.subr.mxu0 0.0
        %404 = vmatpush1.msra.mxu0 0.0
        %405 = vmatprep.subr.mxu0 0.0
        %406 = vmatpush1.msra.mxu0 0.0
        %407 = vmatprep.subr.mxu0 0.0
        %408 = vmatpush1.msra.mxu0 0.0
        %409 = vmatprep.subr.mxu0 0.0
        %410 = vmatpush1.msra.mxu0 0.0
        %411 = vmatprep.subr.mxu0 0.0
        %412 = vmatpush1.msra.mxu0 0.0
        %413 = vmatprep.subr.mxu0 0.0
        %414 = vmatpush1.msra.mxu0 0.0
        %415 = vmatprep.subr.mxu0 0.0
        %416 = vmatpush1.msra.mxu0 0.0
        %417 = vmatprep.subr.mxu0 0.0
        %418 = vmatpush1.msra.mxu0 0.0
        %419 = vmatprep.subr.mxu0 0.0
        %420 = vmatpush1.msra.mxu0 0.0
        %421 = vmatprep.subr.mxu0 0.0
        %422 = vmatpush1.msra.mxu0 0.0
        %423 = vmatprep.subr.mxu0 0.0
        %424 = vmatpush1.msra.mxu0 0.0
        %425 = vmatprep.subr.mxu0 0.0
        %426 = vmatpush1.msra.mxu0 0.0
        %427 = vmatprep.subr.mxu0 0.0
        %428 = vmatpush1.msra.mxu0 0.0
        %429 = vmatprep.subr.mxu0 0.0
        %430 = vmatpush1.msra.mxu0 0.0
        %431 = vmatprep.subr.mxu0 0.0
        %432 = vmatpush1.msra.mxu0 0.0
        %433 = vmatprep.subr.mxu0 0.0
        %434 = vmatpush1.msra.mxu0 0.0
        %435 = vmatprep.subr.mxu0 0.0
        %436 = vmatpush1.msra.mxu0 0.0
        %437 = vmatprep.subr.mxu0 0.0
        %438 = vmatpush1.msra.mxu0 0.0
        %439 = vmatprep.subr.mxu0 0.0
        %440 = vmatpush1.msra.mxu0 0.0
        %441 = vmatprep.subr.mxu0 0.0
        %442 = vmatpush1.msra.mxu0 0.0
        %443 = vmatprep.subr.mxu0 0.0
        %444 = vmatpush1.msra.mxu0 0.0
        %445 = vmatprep.subr.mxu0 0.0
        %446 = vmatpush1.msra.mxu0 0.0
        %447 = vmatprep.subr.mxu0 0.0
        %448 = vmatpush1.msra.mxu0 0.0
        %449 = vmatprep.subr.mxu0 0.0
        %450 = vmatpush1.msra.mxu0 0.0
        %451 = vmatprep.subr.mxu0 0.0
        %452 = vmatpush1.msra.mxu0 0.0
        %453 = vmatprep.subr.mxu0 0.0
        %454 = vmatpush1.msra.mxu0 0.0
        %455 = vmatprep.subr.mxu0 0.0
        %456 = vmatpush1.msra.mxu0 0.0
        %457 = vmatprep.subr.mxu0 0.0
        %458 = vmatpush1.msra.mxu0 0.0
        %459 = vmatprep.subr.mxu0 0.0
        %460 = vmatpush1.msra.mxu0 0.0
        %461 = vmatprep.mubr.f32.mxu0 0.0
        %462 = vmatmul.mubr.f32.gmra.mrb[0].mxu0 %v392
        %v463 = vpop.f32.mrb[0].mxu0
        %v464 = vadd.f32 0.0, %v463
        %v465 = vpop.f32.mrb[0].mxu0
        %466 = vmatprep.mubr.f32.mxu0 0.0
        %467 = vmatmul.mubr.f32.gmra.mrb[0].mxu0 %v395
        %v468 = vpop.f32.mrb[0].mxu0
        %v469 = vadd.f32 0.0, %v468
        %v470 = vpop.f32.mrb[0].mxu0
        %471 = vdwg.mxu0
        %v473 = vsel %vm390, %v386, 0
        %v476 = vsel %vm390, %v387, 0
        %v479 = vsel %vm390, %v388, 0
        %v482 = vsel %vm390, %v389, 0
        %484 = vmatprep.subr.mxu0 0.0
        %485 = vmatpush1.msra.mxu0 %v464
        %486 = vmatprep.subr.mxu0 0.0
        %487 = vmatpush1.msra.mxu0 %v469
        %488 = vmatprep.subr.mxu0 0.0
        %489 = vmatpush1.msra.mxu0 0.0
        %490 = vmatprep.subr.mxu0 0.0
        %491 = vmatpush1.msra.mxu0 0.0
        %492 = vmatprep.subr.mxu0 0.0
        %493 = vmatpush1.msra.mxu0 0.0
        %494 = vmatprep.subr.mxu0 0.0
        %495 = vmatpush1.msra.mxu0 0.0
        %496 = vmatprep.subr.mxu0 0.0
        %497 = vmatpush1.msra.mxu0 0.0
        %498 = vmatprep.subr.mxu0 0.0
        %499 = vmatpush1.msra.mxu0 0.0
        %500 = vmatprep.subr.mxu0 0.0
        %501 = vmatpush1.msra.mxu0 0.0
        %502 = vmatprep.subr.mxu0 0.0
        %503 = vmatpush1.msra.mxu0 0.0
        %504 = vmatprep.subr.mxu0 0.0
        %505 = vmatpush1.msra.mxu0 0.0
        %506 = vmatprep.subr.mxu0 0.0
        %507 = vmatpush1.msra.mxu0 0.0
        %508 = vmatprep.subr.mxu0 0.0
        %509 = vmatpush1.msra.mxu0 0.0
        %510 = vmatprep.subr.mxu0 0.0
        %511 = vmatpush1.msra.mxu0 0.0
        %512 = vmatprep.subr.mxu0 0.0
        %513 = vmatpush1.msra.mxu0 0.0
        %514 = vmatprep.subr.mxu0 0.0
        %515 = vmatpush1.msra.mxu0 0.0
        %516 = vmatprep.subr.mxu0 0.0
        %517 = vmatpush1.msra.mxu0 0.0
        %518 = vmatprep.subr.mxu0 0.0
        %519 = vmatpush1.msra.mxu0 0.0
        %520 = vmatprep.subr.mxu0 0.0
        %521 = vmatpush1.msra.mxu0 0.0
        %522 = vmatprep.subr.mxu0 0.0
        %523 = vmatpush1.msra.mxu0 0.0
        %524 = vmatprep.subr.mxu0 0.0
        %525 = vmatpush1.msra.mxu0 0.0
        %526 = vmatprep.subr.mxu0 0.0
        %527 = vmatpush1.msra.mxu0 0.0
        %528 = vmatprep.subr.mxu0 0.0
        %529 = vmatpush1.msra.mxu0 0.0
        %530 = vmatprep.subr.mxu0 0.0
        %531 = vmatpush1.msra.mxu0 0.0
        %532 = vmatprep.subr.mxu0 0.0
        %533 = vmatpush1.msra.mxu0 0.0
        %534 = vmatprep.subr.mxu0 0.0
        %535 = vmatpush1.msra.mxu0 0.0
        %536 = vmatprep.subr.mxu0 0.0
        %537 = vmatpush1.msra.mxu0 0.0
        %538 = vmatprep.subr.mxu0 0.0
        %539 = vmatpush1.msra.mxu0 0.0
        %540 = vmatprep.subr.mxu0 0.0
        %541 = vmatpush1.msra.mxu0 0.0
        %542 = vmatprep.subr.mxu0 0.0
        %543 = vmatpush1.msra.mxu0 0.0
        %544 = vmatprep.subr.mxu0 0.0
        %545 = vmatpush1.msra.mxu0 0.0
        %546 = vmatprep.subr.mxu0 0.0
        %547 = vmatpush1.msra.mxu0 0.0
        %548 = vmatprep.mubr.f32.mxu0 0.0
        %549 = vmatmul.mubr.f32.gmra.mrb[0].mxu0 %v473
        %v550 = vpop.f32.mrb[0].mxu0
        %v551 = vadd.f32 0.0, %v550
        %v552 = vpop.f32.mrb[0].mxu0
        %553 = vmatprep.mubr.f32.mxu0 0.0
        %554 = vmatmul.mubr.f32.gmra.mrb[0].mxu0 %v476
        %v555 = vpop.f32.mrb[0].mxu0
        %v556 = vadd.f32 0.0, %v555
        %v557 = vpop.f32.mrb[0].mxu0
        %558 = vmatprep.mubr.f32.mxu0 0.0
        %559 = vmatmul.mubr.f32.gmra.mrb[0].mxu0 %v479
        %v560 = vpop.f32.mrb[0].mxu0
        %v561 = vadd.f32 0.0, %v560
        %v562 = vpop.f32.mrb[0].mxu0
        %563 = vmatprep.mubr.f32.mxu0 0.0
        %564 = vmatmul.mubr.f32.gmra.mrb[0].mxu0 %v482
        %v565 = vpop.f32.mrb[0].mxu0
        %v566 = vadd.f32 0.0, %v565
        %v567 = vpop.f32.mrb[0].mxu0
        %568 = vdwg.mxu0
        %vm569 = vcmask 261120
        %570 = vst.msk [vmem:[%s157] sm:$0xff] %vm569, %v551
        %571 = vst.msk [vmem:[%s157 + $0x8] sm:$0xff] %vm569, %v556
        %572 = vst.msk [vmem:[%s157 + $0x10] sm:$0xff] %vm569, %v561
        %573 = vst.msk [vmem:[%s157 + $0x18] sm:$0xff] %vm569, %v566
        %v575 = vsel %vm390, %v309, 0
        %v578 = vsel %vm390, %v310, 0
        %580 = vmatprep.subr.mxu0 0.0
        %581 = vmatpush1.msra.mxu0 %v364
        %582 = vmatprep.subr.mxu0 0.0
        %583 = vmatpush1.msra.mxu0 %v365
        %584 = vmatprep.subr.mxu0 0.0
        %585 = vmatpush1.msra.mxu0 0.0
        %586 = vmatprep.subr.mxu0 0.0
        %587 = vmatpush1.msra.mxu0 0.0
        %588 = vmatprep.subr.mxu0 0.0
        %589 = vmatpush1.msra.mxu0 0.0
        %590 = vmatprep.subr.mxu0 0.0
        %591 = vmatpush1.msra.mxu0 0.0
        %592 = vmatprep.subr.mxu0 0.0
        %593 = vmatpush1.msra.mxu0 0.0
        %594 = vmatprep.subr.mxu0 0.0
        %595 = vmatpush1.msra.mxu0 0.0
        %596 = vmatprep.subr.mxu0 0.0
        %597 = vmatpush1.msra.mxu0 0.0
        %598 = vmatprep.subr.mxu0 0.0
        %599 = vmatpush1.msra.mxu0 0.0
        %600 = vmatprep.subr.mxu0 0.0
        %601 = vmatpush1.msra.mxu0 0.0
        %602 = vmatprep.subr.mxu0 0.0
        %603 = vmatpush1.msra.mxu0 0.0
        %604 = vmatprep.subr.mxu0 0.0
        %605 = vmatpush1.msra.mxu0 0.0
        %606 = vmatprep.subr.mxu0 0.0
        %607 = vmatpush1.msra.mxu0 0.0
        %608 = vmatprep.subr.mxu0 0.0
        %609 = vmatpush1.msra.mxu0 0.0
        %610 = vmatprep.subr.mxu0 0.0
        %611 = vmatpush1.msra.mxu0 0.0
        %612 = vmatprep.subr.mxu0 0.0
        %613 = vmatpush1.msra.mxu0 0.0
        %614 = vmatprep.subr.mxu0 0.0
        %615 = vmatpush1.msra.mxu0 0.0
        %616 = vmatprep.subr.mxu0 0.0
        %617 = vmatpush1.msra.mxu0 0.0
        %618 = vmatprep.subr.mxu0 0.0
        %619 = vmatpush1.msra.mxu0 0.0
        %620 = vmatprep.subr.mxu0 0.0
        %621 = vmatpush1.msra.mxu0 0.0
        %622 = vmatprep.subr.mxu0 0.0
        %623 = vmatpush1.msra.mxu0 0.0
        %624 = vmatprep.subr.mxu0 0.0
        %625 = vmatpush1.msra.mxu0 0.0
        %626 = vmatprep.subr.mxu0 0.0
        %627 = vmatpush1.msra.mxu0 0.0
        %628 = vmatprep.subr.mxu0 0.0
        %629 = vmatpush1.msra.mxu0 0.0
        %630 = vmatprep.subr.mxu0 0.0
        %631 = vmatpush1.msra.mxu0 0.0
        %632 = vmatprep.subr.mxu0 0.0
        %633 = vmatpush1.msra.mxu0 0.0
        %634 = vmatprep.subr.mxu0 0.0
        %635 = vmatpush1.msra.mxu0 0.0
        %636 = vmatprep.subr.mxu0 0.0
        %637 = vmatpush1.msra.mxu0 0.0
        %638 = vmatprep.subr.mxu0 0.0
        %639 = vmatpush1.msra.mxu0 0.0
        %640 = vmatprep.subr.mxu0 0.0
        %641 = vmatpush1.msra.mxu0 0.0
        %642 = vmatprep.subr.mxu0 0.0
        %643 = vmatpush1.msra.mxu0 0.0
        %644 = vmatprep.mubr.f32.mxu0 0.0
        %645 = vmatmul.mubr.f32.gmra.mrb[0].mxu0 %v575
        %v646 = vpop.f32.mrb[0].mxu0
        %v647 = vadd.f32 0.0, %v646
        %v648 = vpop.f32.mrb[0].mxu0
        %649 = vmatprep.mubr.f32.mxu0 0.0
        %650 = vmatmul.mubr.f32.gmra.mrb[0].mxu0 %v578
        %v651 = vpop.f32.mrb[0].mxu0
        %v652 = vadd.f32 0.0, %v651
        %v653 = vpop.f32.mrb[0].mxu0
        %654 = vdwg.mxu0
        %655 = vmatprep.subr.mxu0 0.0
        %656 = vmatpush1.msra.mxu0 %v647
        %657 = vmatprep.subr.mxu0 0.0
        %658 = vmatpush1.msra.mxu0 %v652
        %659 = vmatprep.subr.mxu0 0.0
        %660 = vmatpush1.msra.mxu0 0.0
        %661 = vmatprep.subr.mxu0 0.0
        %662 = vmatpush1.msra.mxu0 0.0
        %663 = vmatprep.subr.mxu0 0.0
        %664 = vmatpush1.msra.mxu0 0.0
        %665 = vmatprep.subr.mxu0 0.0
        %666 = vmatpush1.msra.mxu0 0.0
        %667 = vmatprep.subr.mxu0 0.0
        %668 = vmatpush1.msra.mxu0 0.0
        %669 = vmatprep.subr.mxu0 0.0
        %670 = vmatpush1.msra.mxu0 0.0
        %671 = vmatprep.subr.mxu0 0.0
        %672 = vmatpush1.msra.mxu0 0.0
        %673 = vmatprep.subr.mxu0 0.0
        %674 = vmatpush1.msra.mxu0 0.0
        %675 = vmatprep.subr.mxu0 0.0
        %676 = vmatpush1.msra.mxu0 0.0
        %677 = vmatprep.subr.mxu0 0.0
        %678 = vmatpush1.msra.mxu0 0.0
        %679 = vmatprep.subr.mxu0 0.0
        %680 = vmatpush1.msra.mxu0 0.0
        %681 = vmatprep.subr.mxu0 0.0
        %682 = vmatpush1.msra.mxu0 0.0
        %683 = vmatprep.subr.mxu0 0.0
        %684 = vmatpush1.msra.mxu0 0.0
        %685 = vmatprep.subr.mxu0 0.0
        %686 = vmatpush1.msra.mxu0 0.0
        %687 = vmatprep.subr.mxu0 0.0
        %688 = vmatpush1.msra.mxu0 0.0
        %689 = vmatprep.subr.mxu0 0.0
        %690 = vmatpush1.msra.mxu0 0.0
        %691 = vmatprep.subr.mxu0 0.0
        %692 = vmatpush1.msra.mxu0 0.0
        %693 = vmatprep.subr.mxu0 0.0
        %694 = vmatpush1.msra.mxu0 0.0
        %695 = vmatprep.subr.mxu0 0.0
        %696 = vmatpush1.msra.mxu0 0.0
        %697 = vmatprep.subr.mxu0 0.0
        %698 = vmatpush1.msra.mxu0 0.0
        %699 = vmatprep.subr.mxu0 0.0
        %700 = vmatpush1.msra.mxu0 0.0
        %701 = vmatprep.subr.mxu0 0.0
        %702 = vmatpush1.msra.mxu0 0.0
        %703 = vmatprep.subr.mxu0 0.0
        %704 = vmatpush1.msra.mxu0 0.0
        %705 = vmatprep.subr.mxu0 0.0
        %706 = vmatpush1.msra.mxu0 0.0
        %707 = vmatprep.subr.mxu0 0.0
        %708 = vmatpush1.msra.mxu0 0.0
        %709 = vmatprep.subr.mxu0 0.0
        %710 = vmatpush1.msra.mxu0 0.0
        %711 = vmatprep.subr.mxu0 0.0
        %712 = vmatpush1.msra.mxu0 0.0
        %713 = vmatprep.subr.mxu0 0.0
        %714 = vmatpush1.msra.mxu0 0.0
        %715 = vmatprep.subr.mxu0 0.0
        %716 = vmatpush1.msra.mxu0 0.0
        %717 = vmatprep.subr.mxu0 0.0
        %718 = vmatpush1.msra.mxu0 0.0
        %719 = vmatprep.mubr.f32.mxu0 0.0
        %720 = vmatmul.mubr.f32.gmra.mrb[0].mxu0 %v473
        %v721 = vpop.f32.mrb[0].mxu0
        %v722 = vadd.f32 0.0, %v721
        %v723 = vpop.f32.mrb[0].mxu0
        %724 = vmatprep.mubr.f32.mxu0 0.0
        %725 = vmatmul.mubr.f32.gmra.mrb[0].mxu0 %v476
        %v726 = vpop.f32.mrb[0].mxu0
        %v727 = vadd.f32 0.0, %v726
        %v728 = vpop.f32.mrb[0].mxu0
        %729 = vmatprep.mubr.f32.mxu0 0.0
        %730 = vmatmul.mubr.f32.gmra.mrb[0].mxu0 %v479
        %v731 = vpop.f32.mrb[0].mxu0
        %v732 = vadd.f32 0.0, %v731
        %v733 = vpop.f32.mrb[0].mxu0
        %734 = vmatprep.mubr.f32.mxu0 0.0
        %735 = vmatmul.mubr.f32.gmra.mrb[0].mxu0 %v482
        %v736 = vpop.f32.mrb[0].mxu0
        %v737 = vadd.f32 0.0, %v736
        %v738 = vpop.f32.mrb[0].mxu0
        %739 = vdwg.mxu0
        %s740 = scalar_lea.vmem %s157, 32 [#allocation7]
        %741 = vst.msk [vmem:[%s740] sm:$0xff] %vm569, %v722
        %742 = vst.msk [vmem:[%s740 + $0x8] sm:$0xff] %vm569, %v727
        %743 = vst.msk [vmem:[%s740 + $0x10] sm:$0xff] %vm569, %v732
        %744 = vst.msk [vmem:[%s740 + $0x18] sm:$0xff] %vm569, %v737
        %v746 = vsel %vm390, %v315, 0
        %v749 = vsel %vm390, %v316, 0
        %751 = vmatprep.subr.mxu0 0.0
        %752 = vmatpush1.msra.mxu0 %v364
        %753 = vmatprep.subr.mxu0 0.0
        %754 = vmatpush1.msra.mxu0 %v365
        %755 = vmatprep.subr.mxu0 0.0
        %756 = vmatpush1.msra.mxu0 0.0
        %757 = vmatprep.subr.mxu0 0.0
        %758 = vmatpush1.msra.mxu0 0.0
        %759 = vmatprep.subr.mxu0 0.0
        %760 = vmatpush1.msra.mxu0 0.0
        %761 = vmatprep.subr.mxu0 0.0
        %762 = vmatpush1.msra.mxu0 0.0
        %763 = vmatprep.subr.mxu0 0.0
        %764 = vmatpush1.msra.mxu0 0.0
        %765 = vmatprep.subr.mxu0 0.0
        %766 = vmatpush1.msra.mxu0 0.0
        %767 = vmatprep.subr.mxu0 0.0
        %768 = vmatpush1.msra.mxu0 0.0
        %769 = vmatprep.subr.mxu0 0.0
        %770 = vmatpush1.msra.mxu0 0.0
        %771 = vmatprep.subr.mxu0 0.0
        %772 = vmatpush1.msra.mxu0 0.0
        %773 = vmatprep.subr.mxu0 0.0
        %774 = vmatpush1.msra.mxu0 0.0
        %775 = vmatprep.subr.mxu0 0.0
        %776 = vmatpush1.msra.mxu0 0.0
        %777 = vmatprep.subr.mxu0 0.0
        %778 = vmatpush1.msra.mxu0 0.0
        %779 = vmatprep.subr.mxu0 0.0
        %780 = vmatpush1.msra.mxu0 0.0
        %781 = vmatprep.subr.mxu0 0.0
        %782 = vmatpush1.msra.mxu0 0.0
        %783 = vmatprep.subr.mxu0 0.0
        %784 = vmatpush1.msra.mxu0 0.0
        %785 = vmatprep.subr.mxu0 0.0
        %786 = vmatpush1.msra.mxu0 0.0
        %787 = vmatprep.subr.mxu0 0.0
        %788 = vmatpush1.msra.mxu0 0.0
        %789 = vmatprep.subr.mxu0 0.0
        %790 = vmatpush1.msra.mxu0 0.0
        %791 = vmatprep.subr.mxu0 0.0
        %792 = vmatpush1.msra.mxu0 0.0
        %793 = vmatprep.subr.mxu0 0.0
        %794 = vmatpush1.msra.mxu0 0.0
        %795 = vmatprep.subr.mxu0 0.0
        %796 = vmatpush1.msra.mxu0 0.0
        %797 = vmatprep.subr.mxu0 0.0
        %798 = vmatpush1.msra.mxu0 0.0
        %799 = vmatprep.subr.mxu0 0.0
        %800 = vmatpush1.msra.mxu0 0.0
        %801 = vmatprep.subr.mxu0 0.0
        %802 = vmatpush1.msra.mxu0 0.0
        %803 = vmatprep.subr.mxu0 0.0
        %804 = vmatpush1.msra.mxu0 0.0
        %805 = vmatprep.subr.mxu0 0.0
        %806 = vmatpush1.msra.mxu0 0.0
        %807 = vmatprep.subr.mxu0 0.0
        %808 = vmatpush1.msra.mxu0 0.0
        %809 = vmatprep.subr.mxu0 0.0
        %810 = vmatpush1.msra.mxu0 0.0
        %811 = vmatprep.subr.mxu0 0.0
        %812 = vmatpush1.msra.mxu0 0.0
        %813 = vmatprep.subr.mxu0 0.0
        %814 = vmatpush1.msra.mxu0 0.0
        %815 = vmatprep.mubr.f32.mxu0 0.0
        %816 = vmatmul.mubr.f32.gmra.mrb[0].mxu0 %v746
        %v817 = vpop.f32.mrb[0].mxu0
        %v818 = vadd.f32 0.0, %v817
        %v819 = vpop.f32.mrb[0].mxu0
        %820 = vmatprep.mubr.f32.mxu0 0.0
        %821 = vmatmul.mubr.f32.gmra.mrb[0].mxu0 %v749
        %v822 = vpop.f32.mrb[0].mxu0
        %v823 = vadd.f32 0.0, %v822
        %v824 = vpop.f32.mrb[0].mxu0
        %825 = vdwg.mxu0
        %826 = vmatprep.subr.mxu0 0.0
        %827 = vmatpush1.msra.mxu0 %v818
        %828 = vmatprep.subr.mxu0 0.0
        %829 = vmatpush1.msra.mxu0 %v823
        %830 = vmatprep.subr.mxu0 0.0
        %831 = vmatpush1.msra.mxu0 0.0
        %832 = vmatprep.subr.mxu0 0.0
        %833 = vmatpush1.msra.mxu0 0.0
        %834 = vmatprep.subr.mxu0 0.0
        %835 = vmatpush1.msra.mxu0 0.0
        %836 = vmatprep.subr.mxu0 0.0
        %837 = vmatpush1.msra.mxu0 0.0
        %838 = vmatprep.subr.mxu0 0.0
        %839 = vmatpush1.msra.mxu0 0.0
        %840 = vmatprep.subr.mxu0 0.0
        %841 = vmatpush1.msra.mxu0 0.0
        %842 = vmatprep.subr.mxu0 0.0
        %843 = vmatpush1.msra.mxu0 0.0
        %844 = vmatprep.subr.mxu0 0.0
        %845 = vmatpush1.msra.mxu0 0.0
        %846 = vmatprep.subr.mxu0 0.0
        %847 = vmatpush1.msra.mxu0 0.0
        %848 = vmatprep.subr.mxu0 0.0
        %849 = vmatpush1.msra.mxu0 0.0
        %850 = vmatprep.subr.mxu0 0.0
        %851 = vmatpush1.msra.mxu0 0.0
        %852 = vmatprep.subr.mxu0 0.0
        %853 = vmatpush1.msra.mxu0 0.0
        %854 = vmatprep.subr.mxu0 0.0
        %855 = vmatpush1.msra.mxu0 0.0
        %856 = vmatprep.subr.mxu0 0.0
        %857 = vmatpush1.msra.mxu0 0.0
        %858 = vmatprep.subr.mxu0 0.0
        %859 = vmatpush1.msra.mxu0 0.0
        %860 = vmatprep.subr.mxu0 0.0
        %861 = vmatpush1.msra.mxu0 0.0
        %862 = vmatprep.subr.mxu0 0.0
        %863 = vmatpush1.msra.mxu0 0.0
        %864 = vmatprep.subr.mxu0 0.0
        %865 = vmatpush1.msra.mxu0 0.0
        %866 = vmatprep.subr.mxu0 0.0
        %867 = vmatpush1.msra.mxu0 0.0
        %868 = vmatprep.subr.mxu0 0.0
        %869 = vmatpush1.msra.mxu0 0.0
        %870 = vmatprep.subr.mxu0 0.0
        %871 = vmatpush1.msra.mxu0 0.0
        %872 = vmatprep.subr.mxu0 0.0
        %873 = vmatpush1.msra.mxu0 0.0
        %874 = vmatprep.subr.mxu0 0.0
        %875 = vmatpush1.msra.mxu0 0.0
        %876 = vmatprep.subr.mxu0 0.0
        %877 = vmatpush1.msra.mxu0 0.0
        %878 = vmatprep.subr.mxu0 0.0
        %879 = vmatpush1.msra.mxu0 0.0
        %880 = vmatprep.subr.mxu0 0.0
        %881 = vmatpush1.msra.mxu0 0.0
        %882 = vmatprep.subr.mxu0 0.0
        %883 = vmatpush1.msra.mxu0 0.0
        %884 = vmatprep.subr.mxu0 0.0
        %885 = vmatpush1.msra.mxu0 0.0
        %886 = vmatprep.subr.mxu0 0.0
        %887 = vmatpush1.msra.mxu0 0.0
        %888 = vmatprep.subr.mxu0 0.0
        %889 = vmatpush1.msra.mxu0 0.0
        %890 = vmatprep.mubr.f32.mxu0 0.0
        %891 = vmatmul.mubr.f32.gmra.mrb[0].mxu0 %v473
        %v892 = vpop.f32.mrb[0].mxu0
        %v893 = vadd.f32 0.0, %v892
        %v894 = vpop.f32.mrb[0].mxu0
        %895 = vmatprep.mubr.f32.mxu0 0.0
        %896 = vmatmul.mubr.f32.gmra.mrb[0].mxu0 %v476
        %v897 = vpop.f32.mrb[0].mxu0
        %v898 = vadd.f32 0.0, %v897
        %v899 = vpop.f32.mrb[0].mxu0
        %900 = vmatprep.mubr.f32.mxu0 0.0
        %901 = vmatmul.mubr.f32.gmra.mrb[0].mxu0 %v479
        %v902 = vpop.f32.mrb[0].mxu0
        %v903 = vadd.f32 0.0, %v902
        %v904 = vpop.f32.mrb[0].mxu0
        %905 = vmatprep.mubr.f32.mxu0 0.0
        %906 = vmatmul.mubr.f32.gmra.mrb[0].mxu0 %v482
        %v907 = vpop.f32.mrb[0].mxu0
        %v908 = vadd.f32 0.0, %v907
        %v909 = vpop.f32.mrb[0].mxu0
        %910 = vdwg.mxu0
        %s911 = scalar_lea.vmem %s157, 64 [#allocation7]
        %912 = vst.msk [vmem:[%s911] sm:$0xff] %vm569, %v893
        %913 = vst.msk [vmem:[%s911 + $0x8] sm:$0xff] %vm569, %v898
        %914 = vst.msk [vmem:[%s911 + $0x10] sm:$0xff] %vm569, %v903
        %915 = vst.msk [vmem:[%s911 + $0x18] sm:$0xff] %vm569, %v908
        %v917 = vsel %vm390, %v321, 0
        %v920 = vsel %vm390, %v322, 0
        %922 = vmatprep.subr.mxu0 0.0
        %923 = vmatpush1.msra.mxu0 %v364
        %924 = vmatprep.subr.mxu0 0.0
        %925 = vmatpush1.msra.mxu0 %v365
        %926 = vmatprep.subr.mxu0 0.0
        %927 = vmatpush1.msra.mxu0 0.0
        %928 = vmatprep.subr.mxu0 0.0
        %929 = vmatpush1.msra.mxu0 0.0
        %930 = vmatprep.subr.mxu0 0.0
        %931 = vmatpush1.msra.mxu0 0.0
        %932 = vmatprep.subr.mxu0 0.0
        %933 = vmatpush1.msra.mxu0 0.0
        %934 = vmatprep.subr.mxu0 0.0
        %935 = vmatpush1.msra.mxu0 0.0
        %936 = vmatprep.subr.mxu0 0.0
        %937 = vmatpush1.msra.mxu0 0.0
        %938 = vmatprep.subr.mxu0 0.0
        %939 = vmatpush1.msra.mxu0 0.0
        %940 = vmatprep.subr.mxu0 0.0
        %941 = vmatpush1.msra.mxu0 0.0
        %942 = vmatprep.subr.mxu0 0.0
        %943 = vmatpush1.msra.mxu0 0.0
        %944 = vmatprep.subr.mxu0 0.0
        %945 = vmatpush1.msra.mxu0 0.0
        %946 = vmatprep.subr.mxu0 0.0
        %947 = vmatpush1.msra.mxu0 0.0
        %948 = vmatprep.subr.mxu0 0.0
        %949 = vmatpush1.msra.mxu0 0.0
        %950 = vmatprep.subr.mxu0 0.0
        %951 = vmatpush1.msra.mxu0 0.0
        %952 = vmatprep.subr.mxu0 0.0
        %953 = vmatpush1.msra.mxu0 0.0
        %954 = vmatprep.subr.mxu0 0.0
        %955 = vmatpush1.msra.mxu0 0.0
        %956 = vmatprep.subr.mxu0 0.0
        %957 = vmatpush1.msra.mxu0 0.0
        %958 = vmatprep.subr.mxu0 0.0
        %959 = vmatpush1.msra.mxu0 0.0
        %960 = vmatprep.subr.mxu0 0.0
        %961 = vmatpush1.msra.mxu0 0.0
        %962 = vmatprep.subr.mxu0 0.0
        %963 = vmatpush1.msra.mxu0 0.0
        %964 = vmatprep.subr.mxu0 0.0
        %965 = vmatpush1.msra.mxu0 0.0
        %966 = vmatprep.subr.mxu0 0.0
        %967 = vmatpush1.msra.mxu0 0.0
        %968 = vmatprep.subr.mxu0 0.0
        %969 = vmatpush1.msra.mxu0 0.0
        %970 = vmatprep.subr.mxu0 0.0
        %971 = vmatpush1.msra.mxu0 0.0
        %972 = vmatprep.subr.mxu0 0.0
        %973 = vmatpush1.msra.mxu0 0.0
        %974 = vmatprep.subr.mxu0 0.0
        %975 = vmatpush1.msra.mxu0 0.0
        %976 = vmatprep.subr.mxu0 0.0
        %977 = vmatpush1.msra.mxu0 0.0
        %978 = vmatprep.subr.mxu0 0.0
        %979 = vmatpush1.msra.mxu0 0.0
        %980 = vmatprep.subr.mxu0 0.0
        %981 = vmatpush1.msra.mxu0 0.0
        %982 = vmatprep.subr.mxu0 0.0
        %983 = vmatpush1.msra.mxu0 0.0
        %984 = vmatprep.subr.mxu0 0.0
        %985 = vmatpush1.msra.mxu0 0.0
        %986 = vmatprep.mubr.f32.mxu0 0.0
        %987 = vmatmul.mubr.f32.gmra.mrb[0].mxu0 %v917
        %v988 = vpop.f32.mrb[0].mxu0
        %v989 = vadd.f32 0.0, %v988
        %v990 = vpop.f32.mrb[0].mxu0
        %991 = vmatprep.mubr.f32.mxu0 0.0
        %992 = vmatmul.mubr.f32.gmra.mrb[0].mxu0 %v920
        %v993 = vpop.f32.mrb[0].mxu0
        %v994 = vadd.f32 0.0, %v993
        %v995 = vpop.f32.mrb[0].mxu0
        %996 = vdwg.mxu0
        %997 = vmatprep.subr.mxu0 0.0
        %998 = vmatpush1.msra.mxu0 %v989
        %999 = vmatprep.subr.mxu0 0.0
        %1000 = vmatpush1.msra.mxu0 %v994
        %1001 = vmatprep.subr.mxu0 0.0
        %1002 = vmatpush1.msra.mxu0 0.0
        %1003 = vmatprep.subr.mxu0 0.0
        %1004 = vmatpush1.msra.mxu0 0.0
        %1005 = vmatprep.subr.mxu0 0.0
        %1006 = vmatpush1.msra.mxu0 0.0
        %1007 = vmatprep.subr.mxu0 0.0
        %1008 = vmatpush1.msra.mxu0 0.0
        %1009 = vmatprep.subr.mxu0 0.0
        %1010 = vmatpush1.msra.mxu0 0.0
        %1011 = vmatprep.subr.mxu0 0.0
        %1012 = vmatpush1.msra.mxu0 0.0
        %1013 = vmatprep.subr.mxu0 0.0
        %1014 = vmatpush1.msra.mxu0 0.0
        %1015 = vmatprep.subr.mxu0 0.0
        %1016 = vmatpush1.msra.mxu0 0.0
        %1017 = vmatprep.subr.mxu0 0.0
        %1018 = vmatpush1.msra.mxu0 0.0
        %1019 = vmatprep.subr.mxu0 0.0
        %1020 = vmatpush1.msra.mxu0 0.0
        %1021 = vmatprep.subr.mxu0 0.0
        %1022 = vmatpush1.msra.mxu0 0.0
        %1023 = vmatprep.subr.mxu0 0.0
        %1024 = vmatpush1.msra.mxu0 0.0
        %1025 = vmatprep.subr.mxu0 0.0
        %1026 = vmatpush1.msra.mxu0 0.0
        %1027 = vmatprep.subr.mxu0 0.0
        %1028 = vmatpush1.msra.mxu0 0.0
        %1029 = vmatprep.subr.mxu0 0.0
        %1030 = vmatpush1.msra.mxu0 0.0
        %1031 = vmatprep.subr.mxu0 0.0
        %1032 = vmatpush1.msra.mxu0 0.0
        %1033 = vmatprep.subr.mxu0 0.0
        %1034 = vmatpush1.msra.mxu0 0.0
        %1035 = vmatprep.subr.mxu0 0.0
        %1036 = vmatpush1.msra.mxu0 0.0
        %1037 = vmatprep.subr.mxu0 0.0
        %1038 = vmatpush1.msra.mxu0 0.0
        %1039 = vmatprep.subr.mxu0 0.0
        %1040 = vmatpush1.msra.mxu0 0.0
        %1041 = vmatprep.subr.mxu0 0.0
        %1042 = vmatpush1.msra.mxu0 0.0
        %1043 = vmatprep.subr.mxu0 0.0
        %1044 = vmatpush1.msra.mxu0 0.0
        %1045 = vmatprep.subr.mxu0 0.0
        %1046 = vmatpush1.msra.mxu0 0.0
        %1047 = vmatprep.subr.mxu0 0.0
        %1048 = vmatpush1.msra.mxu0 0.0
        %1049 = vmatprep.subr.mxu0 0.0
        %1050 = vmatpush1.msra.mxu0 0.0
        %1051 = vmatprep.subr.mxu0 0.0
        %1052 = vmatpush1.msra.mxu0 0.0
        %1053 = vmatprep.subr.mxu0 0.0
        %1054 = vmatpush1.msra.mxu0 0.0
        %1055 = vmatprep.subr.mxu0 0.0
        %1056 = vmatpush1.msra.mxu0 0.0
        %1057 = vmatprep.subr.mxu0 0.0
        %1058 = vmatpush1.msra.mxu0 0.0
        %1059 = vmatprep.subr.mxu0 0.0
        %1060 = vmatpush1.msra.mxu0 0.0
        %1061 = vmatprep.mubr.f32.mxu0 0.0
        %1062 = vmatmul.mubr.f32.gmra.mrb[0].mxu0 %v473
        %v1063 = vpop.f32.mrb[0].mxu0
        %v1064 = vadd.f32 0.0, %v1063
        %v1065 = vpop.f32.mrb[0].mxu0
        %1066 = vmatprep.mubr.f32.mxu0 0.0
        %1067 = vmatmul.mubr.f32.gmra.mrb[0].mxu0 %v476
        %v1068 = vpop.f32.mrb[0].mxu0
        %v1069 = vadd.f32 0.0, %v1068
        %v1070 = vpop.f32.mrb[0].mxu0
        %1071 = vmatprep.mubr.f32.mxu0 0.0
        %1072 = vmatmul.mubr.f32.gmra.mrb[0].mxu0 %v479
        %v1073 = vpop.f32.mrb[0].mxu0
        %v1074 = vadd.f32 0.0, %v1073
        %v1075 = vpop.f32.mrb[0].mxu0
        %1076 = vmatprep.mubr.f32.mxu0 0.0
        %1077 = vmatmul.mubr.f32.gmra.mrb[0].mxu0 %v482
        %v1078 = vpop.f32.mrb[0].mxu0
        %v1079 = vadd.f32 0.0, %v1078
        %v1080 = vpop.f32.mrb[0].mxu0
        %1081 = vdwg.mxu0
        %s1082 = scalar_lea.vmem %s157, 96 [#allocation7]
        %1083 = vst.msk [vmem:[%s1082] sm:$0xff] %vm569, %v1064
        %1084 = vst.msk [vmem:[%s1082 + $0x8] sm:$0xff] %vm569, %v1069
        %1085 = vst.msk [vmem:[%s1082 + $0x10] sm:$0xff] %vm569, %v1074
        %1086 = vst.msk [vmem:[%s1082 + $0x18] sm:$0xff] %vm569, %v1079
        %v1088 = vsel %vm390, %v327, 0
        %v1091 = vsel %vm390, %v328, 0
        %1093 = vmatprep.subr.mxu0 0.0
        %1094 = vmatpush1.msra.mxu0 %v364
        %1095 = vmatprep.subr.mxu0 0.0
        %1096 = vmatpush1.msra.mxu0 %v365
        %1097 = vmatprep.subr.mxu0 0.0
        %1098 = vmatpush1.msra.mxu0 0.0
        %1099 = vmatprep.subr.mxu0 0.0
        %1100 = vmatpush1.msra.mxu0 0.0
        %1101 = vmatprep.subr.mxu0 0.0
        %1102 = vmatpush1.msra.mxu0 0.0
        %1103 = vmatprep.subr.mxu0 0.0
        %1104 = vmatpush1.msra.mxu0 0.0
        %1105 = vmatprep.subr.mxu0 0.0
        %1106 = vmatpush1.msra.mxu0 0.0
        %1107 = vmatprep.subr.mxu0 0.0
        %1108 = vmatpush1.msra.mxu0 0.0
        %1109 = vmatprep.subr.mxu0 0.0
        %1110 = vmatpush1.msra.mxu0 0.0
        %1111 = vmatprep.subr.mxu0 0.0
        %1112 = vmatpush1.msra.mxu0 0.0
        %1113 = vmatprep.subr.mxu0 0.0
        %1114 = vmatpush1.msra.mxu0 0.0
        %1115 = vmatprep.subr.mxu0 0.0
        %1116 = vmatpush1.msra.mxu0 0.0
        %1117 = vmatprep.subr.mxu0 0.0
        %1118 = vmatpush1.msra.mxu0 0.0
        %1119 = vmatprep.subr.mxu0 0.0
        %1120 = vmatpush1.msra.mxu0 0.0
        %1121 = vmatprep.subr.mxu0 0.0
        %1122 = vmatpush1.msra.mxu0 0.0
        %1123 = vmatprep.subr.mxu0 0.0
        %1124 = vmatpush1.msra.mxu0 0.0
        %1125 = vmatprep.subr.mxu0 0.0
        %1126 = vmatpush1.msra.mxu0 0.0
        %1127 = vmatprep.subr.mxu0 0.0
        %1128 = vmatpush1.msra.mxu0 0.0
        %1129 = vmatprep.subr.mxu0 0.0
        %1130 = vmatpush1.msra.mxu0 0.0
        %1131 = vmatprep.subr.mxu0 0.0
        %1132 = vmatpush1.msra.mxu0 0.0
        %1133 = vmatprep.subr.mxu0 0.0
        %1134 = vmatpush1.msra.mxu0 0.0
        %1135 = vmatprep.subr.mxu0 0.0
        %1136 = vmatpush1.msra.mxu0 0.0
        %1137 = vmatprep.subr.mxu0 0.0
        %1138 = vmatpush1.msra.mxu0 0.0
        %1139 = vmatprep.subr.mxu0 0.0
        %1140 = vmatpush1.msra.mxu0 0.0
        %1141 = vmatprep.subr.mxu0 0.0
        %1142 = vmatpush1.msra.mxu0 0.0
        %1143 = vmatprep.subr.mxu0 0.0
        %1144 = vmatpush1.msra.mxu0 0.0
        %1145 = vmatprep.subr.mxu0 0.0
        %1146 = vmatpush1.msra.mxu0 0.0
        %1147 = vmatprep.subr.mxu0 0.0
        %1148 = vmatpush1.msra.mxu0 0.0
        %1149 = vmatprep.subr.mxu0 0.0
        %1150 = vmatpush1.msra.mxu0 0.0
        %1151 = vmatprep.subr.mxu0 0.0
        %1152 = vmatpush1.msra.mxu0 0.0
        %1153 = vmatprep.subr.mxu0 0.0
        %1154 = vmatpush1.msra.mxu0 0.0
        %1155 = vmatprep.subr.mxu0 0.0
        %1156 = vmatpush1.msra.mxu0 0.0
        %1157 = vmatprep.mubr.f32.mxu0 0.0
        %1158 = vmatmul.mubr.f32.gmra.mrb[0].mxu0 %v1088
        %v1159 = vpop.f32.mrb[0].mxu0
        %v1160 = vadd.f32 0.0, %v1159
        %v1161 = vpop.f32.mrb[0].mxu0
        %1162 = vmatprep.mubr.f32.mxu0 0.0
        %1163 = vmatmul.mubr.f32.gmra.mrb[0].mxu0 %v1091
        %v1164 = vpop.f32.mrb[0].mxu0
        %v1165 = vadd.f32 0.0, %v1164
        %v1166 = vpop.f32.mrb[0].mxu0
        %1167 = vdwg.mxu0
        %1168 = vmatprep.subr.mxu0 0.0
        %1169 = vmatpush1.msra.mxu0 %v1160
        %1170 = vmatprep.subr.mxu0 0.0
        %1171 = vmatpush1.msra.mxu0 %v1165
        %1172 = vmatprep.subr.mxu0 0.0
        %1173 = vmatpush1.msra.mxu0 0.0
        %1174 = vmatprep.subr.mxu0 0.0
        %1175 = vmatpush1.msra.mxu0 0.0
        %1176 = vmatprep.subr.mxu0 0.0
        %1177 = vmatpush1.msra.mxu0 0.0
        %1178 = vmatprep.subr.mxu0 0.0
        %1179 = vmatpush1.msra.mxu0 0.0
        %1180 = vmatprep.subr.mxu0 0.0
        %1181 = vmatpush1.msra.mxu0 0.0
        %1182 = vmatprep.subr.mxu0 0.0
        %1183 = vmatpush1.msra.mxu0 0.0
        %1184 = vmatprep.subr.mxu0 0.0
        %1185 = vmatpush1.msra.mxu0 0.0
        %1186 = vmatprep.subr.mxu0 0.0
        %1187 = vmatpush1.msra.mxu0 0.0
        %1188 = vmatprep.subr.mxu0 0.0
        %1189 = vmatpush1.msra.mxu0 0.0
        %1190 = vmatprep.subr.mxu0 0.0
        %1191 = vmatpush1.msra.mxu0 0.0
        %1192 = vmatprep.subr.mxu0 0.0
        %1193 = vmatpush1.msra.mxu0 0.0
        %1194 = vmatprep.subr.mxu0 0.0
        %1195 = vmatpush1.msra.mxu0 0.0
        %1196 = vmatprep.subr.mxu0 0.0
        %1197 = vmatpush1.msra.mxu0 0.0
        %1198 = vmatprep.subr.mxu0 0.0
        %1199 = vmatpush1.msra.mxu0 0.0
        %1200 = vmatprep.subr.mxu0 0.0
        %1201 = vmatpush1.msra.mxu0 0.0
        %1202 = vmatprep.subr.mxu0 0.0
        %1203 = vmatpush1.msra.mxu0 0.0
        %1204 = vmatprep.subr.mxu0 0.0
        %1205 = vmatpush1.msra.mxu0 0.0
        %1206 = vmatprep.subr.mxu0 0.0
        %1207 = vmatpush1.msra.mxu0 0.0
        %1208 = vmatprep.subr.mxu0 0.0
        %1209 = vmatpush1.msra.mxu0 0.0
        %1210 = vmatprep.subr.mxu0 0.0
        %1211 = vmatpush1.msra.mxu0 0.0
        %1212 = vmatprep.subr.mxu0 0.0
        %1213 = vmatpush1.msra.mxu0 0.0
        %1214 = vmatprep.subr.mxu0 0.0
        %1215 = vmatpush1.msra.mxu0 0.0
        %1216 = vmatprep.subr.mxu0 0.0
        %1217 = vmatpush1.msra.mxu0 0.0
        %1218 = vmatprep.subr.mxu0 0.0
        %1219 = vmatpush1.msra.mxu0 0.0
        %1220 = vmatprep.subr.mxu0 0.0
        %1221 = vmatpush1.msra.mxu0 0.0
        %1222 = vmatprep.subr.mxu0 0.0
        %1223 = vmatpush1.msra.mxu0 0.0
        %1224 = vmatprep.subr.mxu0 0.0
        %1225 = vmatpush1.msra.mxu0 0.0
        %1226 = vmatprep.subr.mxu0 0.0
        %1227 = vmatpush1.msra.mxu0 0.0
        %1228 = vmatprep.subr.mxu0 0.0
        %1229 = vmatpush1.msra.mxu0 0.0
        %1230 = vmatprep.subr.mxu0 0.0
        %1231 = vmatpush1.msra.mxu0 0.0
        %1232 = vmatprep.mubr.f32.mxu0 0.0
        %1233 = vmatmul.mubr.f32.gmra.mrb[0].mxu0 %v473
        %v1234 = vpop.f32.mrb[0].mxu0
        %v1235 = vadd.f32 0.0, %v1234
        %v1236 = vpop.f32.mrb[0].mxu0
        %1237 = vmatprep.mubr.f32.mxu0 0.0
        %1238 = vmatmul.mubr.f32.gmra.mrb[0].mxu0 %v476
        %v1239 = vpop.f32.mrb[0].mxu0
        %v1240 = vadd.f32 0.0, %v1239
        %v1241 = vpop.f32.mrb[0].mxu0
        %1242 = vmatprep.mubr.f32.mxu0 0.0
        %1243 = vmatmul.mubr.f32.gmra.mrb[0].mxu0 %v479
        %v1244 = vpop.f32.mrb[0].mxu0
        %v1245 = vadd.f32 0.0, %v1244
        %v1246 = vpop.f32.mrb[0].mxu0
        %1247 = vmatprep.mubr.f32.mxu0 0.0
        %1248 = vmatmul.mubr.f32.gmra.mrb[0].mxu0 %v482
        %v1249 = vpop.f32.mrb[0].mxu0
        %v1250 = vadd.f32 0.0, %v1249
        %v1251 = vpop.f32.mrb[0].mxu0
        %1252 = vdwg.mxu0
        %s1253 = scalar_lea.vmem %s157, 128 [#allocation7]
        %1254 = vst.msk [vmem:[%s1253] sm:$0xff] %vm569, %v1235
        %1255 = vst.msk [vmem:[%s1253 + $0x8] sm:$0xff] %vm569, %v1240
        %1256 = vst.msk [vmem:[%s1253 + $0x10] sm:$0xff] %vm569, %v1245
        %1257 = vst.msk [vmem:[%s1253 + $0x18] sm:$0xff] %vm569, %v1250
        %v1259 = vsel %vm390, %v333, 0
        %v1262 = vsel %vm390, %v334, 0
        %1264 = vmatprep.subr.mxu0 0.0
        %1265 = vmatpush1.msra.mxu0 %v364
        %1266 = vmatprep.subr.mxu0 0.0
        %1267 = vmatpush1.msra.mxu0 %v365
        %1268 = vmatprep.subr.mxu0 0.0
        %1269 = vmatpush1.msra.mxu0 0.0
        %1270 = vmatprep.subr.mxu0 0.0
        %1271 = vmatpush1.msra.mxu0 0.0
        %1272 = vmatprep.subr.mxu0 0.0
        %1273 = vmatpush1.msra.mxu0 0.0
        %1274 = vmatprep.subr.mxu0 0.0
        %1275 = vmatpush1.msra.mxu0 0.0
        %1276 = vmatprep.subr.mxu0 0.0
        %1277 = vmatpush1.msra.mxu0 0.0
        %1278 = vmatprep.subr.mxu0 0.0
        %1279 = vmatpush1.msra.mxu0 0.0
        %1280 = vmatprep.subr.mxu0 0.0
        %1281 = vmatpush1.msra.mxu0 0.0
        %1282 = vmatprep.subr.mxu0 0.0
        %1283 = vmatpush1.msra.mxu0 0.0
        %1284 = vmatprep.subr.mxu0 0.0
        %1285 = vmatpush1.msra.mxu0 0.0
        %1286 = vmatprep.subr.mxu0 0.0
        %1287 = vmatpush1.msra.mxu0 0.0
        %1288 = vmatprep.subr.mxu0 0.0
        %1289 = vmatpush1.msra.mxu0 0.0
        %1290 = vmatprep.subr.mxu0 0.0
        %1291 = vmatpush1.msra.mxu0 0.0
        %1292 = vmatprep.subr.mxu0 0.0
        %1293 = vmatpush1.msra.mxu0 0.0
        %1294 = vmatprep.subr.mxu0 0.0
        %1295 = vmatpush1.msra.mxu0 0.0
        %1296 = vmatprep.subr.mxu0 0.0
        %1297 = vmatpush1.msra.mxu0 0.0
        %1298 = vmatprep.subr.mxu0 0.0
        %1299 = vmatpush1.msra.mxu0 0.0
        %1300 = vmatprep.subr.mxu0 0.0
        %1301 = vmatpush1.msra.mxu0 0.0
        %1302 = vmatprep.subr.mxu0 0.0
        %1303 = vmatpush1.msra.mxu0 0.0
        %1304 = vmatprep.subr.mxu0 0.0
        %1305 = vmatpush1.msra.mxu0 0.0
        %1306 = vmatprep.subr.mxu0 0.0
        %1307 = vmatpush1.msra.mxu0 0.0
        %1308 = vmatprep.subr.mxu0 0.0
        %1309 = vmatpush1.msra.mxu0 0.0
        %1310 = vmatprep.subr.mxu0 0.0
        %1311 = vmatpush1.msra.mxu0 0.0
        %1312 = vmatprep.subr.mxu0 0.0
        %1313 = vmatpush1.msra.mxu0 0.0
        %1314 = vmatprep.subr.mxu0 0.0
        %1315 = vmatpush1.msra.mxu0 0.0
        %1316 = vmatprep.subr.mxu0 0.0
        %1317 = vmatpush1.msra.mxu0 0.0
        %1318 = vmatprep.subr.mxu0 0.0
        %1319 = vmatpush1.msra.mxu0 0.0
        %1320 = vmatprep.subr.mxu0 0.0
        %1321 = vmatpush1.msra.mxu0 0.0
        %1322 = vmatprep.subr.mxu0 0.0
        %1323 = vmatpush1.msra.mxu0 0.0
        %1324 = vmatprep.subr.mxu0 0.0
        %1325 = vmatpush1.msra.mxu0 0.0
        %1326 = vmatprep.subr.mxu0 0.0
        %1327 = vmatpush1.msra.mxu0 0.0
        %1328 = vmatprep.mubr.f32.mxu0 0.0
        %1329 = vmatmul.mubr.f32.gmra.mrb[0].mxu0 %v1259
        %v1330 = vpop.f32.mrb[0].mxu0
        %v1331 = vadd.f32 0.0, %v1330
        %v1332 = vpop.f32.mrb[0].mxu0
        %1333 = vmatprep.mubr.f32.mxu0 0.0
        %1334 = vmatmul.mubr.f32.gmra.mrb[0].mxu0 %v1262
        %v1335 = vpop.f32.mrb[0].mxu0
        %v1336 = vadd.f32 0.0, %v1335
        %v1337 = vpop.f32.mrb[0].mxu0
        %1338 = vdwg.mxu0
        %1339 = vmatprep.subr.mxu0 0.0
        %1340 = vmatpush1.msra.mxu0 %v1331
        %1341 = vmatprep.subr.mxu0 0.0
        %1342 = vmatpush1.msra.mxu0 %v1336
        %1343 = vmatprep.subr.mxu0 0.0
        %1344 = vmatpush1.msra.mxu0 0.0
        %1345 = vmatprep.subr.mxu0 0.0
        %1346 = vmatpush1.msra.mxu0 0.0
        %1347 = vmatprep.subr.mxu0 0.0
        %1348 = vmatpush1.msra.mxu0 0.0
        %1349 = vmatprep.subr.mxu0 0.0
        %1350 = vmatpush1.msra.mxu0 0.0
        %1351 = vmatprep.subr.mxu0 0.0
        %1352 = vmatpush1.msra.mxu0 0.0
        %1353 = vmatprep.subr.mxu0 0.0
        %1354 = vmatpush1.msra.mxu0 0.0
        %1355 = vmatprep.subr.mxu0 0.0
        %1356 = vmatpush1.msra.mxu0 0.0
        %1357 = vmatprep.subr.mxu0 0.0
        %1358 = vmatpush1.msra.mxu0 0.0
        %1359 = vmatprep.subr.mxu0 0.0
        %1360 = vmatpush1.msra.mxu0 0.0
        %1361 = vmatprep.subr.mxu0 0.0
        %1362 = vmatpush1.msra.mxu0 0.0
        %1363 = vmatprep.subr.mxu0 0.0
        %1364 = vmatpush1.msra.mxu0 0.0
        %1365 = vmatprep.subr.mxu0 0.0
        %1366 = vmatpush1.msra.mxu0 0.0
        %1367 = vmatprep.subr.mxu0 0.0
        %1368 = vmatpush1.msra.mxu0 0.0
        %1369 = vmatprep.subr.mxu0 0.0
        %1370 = vmatpush1.msra.mxu0 0.0
        %1371 = vmatprep.subr.mxu0 0.0
        %1372 = vmatpush1.msra.mxu0 0.0
        %1373 = vmatprep.subr.mxu0 0.0
        %1374 = vmatpush1.msra.mxu0 0.0
        %1375 = vmatprep.subr.mxu0 0.0
        %1376 = vmatpush1.msra.mxu0 0.0
        %1377 = vmatprep.subr.mxu0 0.0
        %1378 = vmatpush1.msra.mxu0 0.0
        %1379 = vmatprep.subr.mxu0 0.0
        %1380 = vmatpush1.msra.mxu0 0.0
        %1381 = vmatprep.subr.mxu0 0.0
        %1382 = vmatpush1.msra.mxu0 0.0
        %1383 = vmatprep.subr.mxu0 0.0
        %1384 = vmatpush1.msra.mxu0 0.0
        %1385 = vmatprep.subr.mxu0 0.0
        %1386 = vmatpush1.msra.mxu0 0.0
        %1387 = vmatprep.subr.mxu0 0.0
        %1388 = vmatpush1.msra.mxu0 0.0
        %1389 = vmatprep.subr.mxu0 0.0
        %1390 = vmatpush1.msra.mxu0 0.0
        %1391 = vmatprep.subr.mxu0 0.0
        %1392 = vmatpush1.msra.mxu0 0.0
        %1393 = vmatprep.subr.mxu0 0.0
        %1394 = vmatpush1.msra.mxu0 0.0
        %1395 = vmatprep.subr.mxu0 0.0
        %1396 = vmatpush1.msra.mxu0 0.0
        %1397 = vmatprep.subr.mxu0 0.0
        %1398 = vmatpush1.msra.mxu0 0.0
        %1399 = vmatprep.subr.mxu0 0.0
        %1400 = vmatpush1.msra.mxu0 0.0
        %1401 = vmatprep.subr.mxu0 0.0
        %1402 = vmatpush1.msra.mxu0 0.0
        %1403 = vmatprep.mubr.f32.mxu0 0.0
        %1404 = vmatmul.mubr.f32.gmra.mrb[0].mxu0 %v473
        %v1405 = vpop.f32.mrb[0].mxu0
        %v1406 = vadd.f32 0.0, %v1405
        %v1407 = vpop.f32.mrb[0].mxu0
        %1408 = vmatprep.mubr.f32.mxu0 0.0
        %1409 = vmatmul.mubr.f32.gmra.mrb[0].mxu0 %v476
        %v1410 = vpop.f32.mrb[0].mxu0
        %v1411 = vadd.f32 0.0, %v1410
        %v1412 = vpop.f32.mrb[0].mxu0
        %1413 = vmatprep.mubr.f32.mxu0 0.0
        %1414 = vmatmul.mubr.f32.gmra.mrb[0].mxu0 %v479
        %v1415 = vpop.f32.mrb[0].mxu0
        %v1416 = vadd.f32 0.0, %v1415
        %v1417 = vpop.f32.mrb[0].mxu0
        %1418 = vmatprep.mubr.f32.mxu0 0.0
        %1419 = vmatmul.mubr.f32.gmra.mrb[0].mxu0 %v482
        %v1420 = vpop.f32.mrb[0].mxu0
        %v1421 = vadd.f32 0.0, %v1420
        %v1422 = vpop.f32.mrb[0].mxu0
        %1423 = vdwg.mxu0
        %s1424 = scalar_lea.vmem %s157, 160 [#allocation7]
        %1425 = vst.msk [vmem:[%s1424] sm:$0xff] %vm569, %v1406
        %1426 = vst.msk [vmem:[%s1424 + $0x8] sm:$0xff] %vm569, %v1411
        %1427 = vst.msk [vmem:[%s1424 + $0x10] sm:$0xff] %vm569, %v1416
        %1428 = vst.msk [vmem:[%s1424 + $0x18] sm:$0xff] %vm569, %v1421
        %v1430 = vsel %vm390, %v339, 0
        %v1433 = vsel %vm390, %v340, 0
        %1435 = vmatprep.subr.mxu0 0.0
        %1436 = vmatpush1.msra.mxu0 %v364
        %1437 = vmatprep.subr.mxu0 0.0
        %1438 = vmatpush1.msra.mxu0 %v365
        %1439 = vmatprep.subr.mxu0 0.0
        %1440 = vmatpush1.msra.mxu0 0.0
        %1441 = vmatprep.subr.mxu0 0.0
        %1442 = vmatpush1.msra.mxu0 0.0
        %1443 = vmatprep.subr.mxu0 0.0
        %1444 = vmatpush1.msra.mxu0 0.0
        %1445 = vmatprep.subr.mxu0 0.0
        %1446 = vmatpush1.msra.mxu0 0.0
        %1447 = vmatprep.subr.mxu0 0.0
        %1448 = vmatpush1.msra.mxu0 0.0
        %1449 = vmatprep.subr.mxu0 0.0
        %1450 = vmatpush1.msra.mxu0 0.0
        %1451 = vmatprep.subr.mxu0 0.0
        %1452 = vmatpush1.msra.mxu0 0.0
        %1453 = vmatprep.subr.mxu0 0.0
        %1454 = vmatpush1.msra.mxu0 0.0
        %1455 = vmatprep.subr.mxu0 0.0
        %1456 = vmatpush1.msra.mxu0 0.0
        %1457 = vmatprep.subr.mxu0 0.0
        %1458 = vmatpush1.msra.mxu0 0.0
        %1459 = vmatprep.subr.mxu0 0.0
        %1460 = vmatpush1.msra.mxu0 0.0
        %1461 = vmatprep.subr.mxu0 0.0
        %1462 = vmatpush1.msra.mxu0 0.0
        %1463 = vmatprep.subr.mxu0 0.0
        %1464 = vmatpush1.msra.mxu0 0.0
        %1465 = vmatprep.subr.mxu0 0.0
        %1466 = vmatpush1.msra.mxu0 0.0
        %1467 = vmatprep.subr.mxu0 0.0
        %1468 = vmatpush1.msra.mxu0 0.0
        %1469 = vmatprep.subr.mxu0 0.0
        %1470 = vmatpush1.msra.mxu0 0.0
        %1471 = vmatprep.subr.mxu0 0.0
        %1472 = vmatpush1.msra.mxu0 0.0
        %1473 = vmatprep.subr.mxu0 0.0
        %1474 = vmatpush1.msra.mxu0 0.0
        %1475 = vmatprep.subr.mxu0 0.0
        %1476 = vmatpush1.msra.mxu0 0.0
        %1477 = vmatprep.subr.mxu0 0.0
        %1478 = vmatpush1.msra.mxu0 0.0
        %1479 = vmatprep.subr.mxu0 0.0
        %1480 = vmatpush1.msra.mxu0 0.0
        %1481 = vmatprep.subr.mxu0 0.0
        %1482 = vmatpush1.msra.mxu0 0.0
        %1483 = vmatprep.subr.mxu0 0.0
        %1484 = vmatpush1.msra.mxu0 0.0
        %1485 = vmatprep.subr.mxu0 0.0
        %1486 = vmatpush1.msra.mxu0 0.0
        %1487 = vmatprep.subr.mxu0 0.0
        %1488 = vmatpush1.msra.mxu0 0.0
        %1489 = vmatprep.subr.mxu0 0.0
        %1490 = vmatpush1.msra.mxu0 0.0
        %1491 = vmatprep.subr.mxu0 0.0
        %1492 = vmatpush1.msra.mxu0 0.0
        %1493 = vmatprep.subr.mxu0 0.0
        %1494 = vmatpush1.msra.mxu0 0.0
        %1495 = vmatprep.subr.mxu0 0.0
        %1496 = vmatpush1.msra.mxu0 0.0
        %1497 = vmatprep.subr.mxu0 0.0
        %1498 = vmatpush1.msra.mxu0 0.0
        %1499 = vmatprep.mubr.f32.mxu0 0.0
        %1500 = vmatmul.mubr.f32.gmra.mrb[0].mxu0 %v1430
        %v1501 = vpop.f32.mrb[0].mxu0
        %v1502 = vadd.f32 0.0, %v1501
        %v1503 = vpop.f32.mrb[0].mxu0
        %1504 = vmatprep.mubr.f32.mxu0 0.0
        %1505 = vmatmul.mubr.f32.gmra.mrb[0].mxu0 %v1433
        %v1506 = vpop.f32.mrb[0].mxu0
        %v1507 = vadd.f32 0.0, %v1506
        %v1508 = vpop.f32.mrb[0].mxu0
        %1509 = vdwg.mxu0
        %1510 = vmatprep.subr.mxu0 0.0
        %1511 = vmatpush1.msra.mxu0 %v1502
        %1512 = vmatprep.subr.mxu0 0.0
        %1513 = vmatpush1.msra.mxu0 %v1507
        %1514 = vmatprep.subr.mxu0 0.0
        %1515 = vmatpush1.msra.mxu0 0.0
        %1516 = vmatprep.subr.mxu0 0.0
        %1517 = vmatpush1.msra.mxu0 0.0
        %1518 = vmatprep.subr.mxu0 0.0
        %1519 = vmatpush1.msra.mxu0 0.0
        %1520 = vmatprep.subr.mxu0 0.0
        %1521 = vmatpush1.msra.mxu0 0.0
        %1522 = vmatprep.subr.mxu0 0.0
        %1523 = vmatpush1.msra.mxu0 0.0
        %1524 = vmatprep.subr.mxu0 0.0
        %1525 = vmatpush1.msra.mxu0 0.0
        %1526 = vmatprep.subr.mxu0 0.0
        %1527 = vmatpush1.msra.mxu0 0.0
        %1528 = vmatprep.subr.mxu0 0.0
        %1529 = vmatpush1.msra.mxu0 0.0
        %1530 = vmatprep.subr.mxu0 0.0
        %1531 = vmatpush1.msra.mxu0 0.0
        %1532 = vmatprep.subr.mxu0 0.0
        %1533 = vmatpush1.msra.mxu0 0.0
        %1534 = vmatprep.subr.mxu0 0.0
        %1535 = vmatpush1.msra.mxu0 0.0
        %1536 = vmatprep.subr.mxu0 0.0
        %1537 = vmatpush1.msra.mxu0 0.0
        %1538 = vmatprep.subr.mxu0 0.0
        %1539 = vmatpush1.msra.mxu0 0.0
        %1540 = vmatprep.subr.mxu0 0.0
        %1541 = vmatpush1.msra.mxu0 0.0
        %1542 = vmatprep.subr.mxu0 0.0
        %1543 = vmatpush1.msra.mxu0 0.0
        %1544 = vmatprep.subr.mxu0 0.0
        %1545 = vmatpush1.msra.mxu0 0.0
        %1546 = vmatprep.subr.mxu0 0.0
        %1547 = vmatpush1.msra.mxu0 0.0
        %1548 = vmatprep.subr.mxu0 0.0
        %1549 = vmatpush1.msra.mxu0 0.0
        %1550 = vmatprep.subr.mxu0 0.0
        %1551 = vmatpush1.msra.mxu0 0.0
        %1552 = vmatprep.subr.mxu0 0.0
        %1553 = vmatpush1.msra.mxu0 0.0
        %1554 = vmatprep.subr.mxu0 0.0
        %1555 = vmatpush1.msra.mxu0 0.0
        %1556 = vmatprep.subr.mxu0 0.0
        %1557 = vmatpush1.msra.mxu0 0.0
        %1558 = vmatprep.subr.mxu0 0.0
        %1559 = vmatpush1.msra.mxu0 0.0
        %1560 = vmatprep.subr.mxu0 0.0
        %1561 = vmatpush1.msra.mxu0 0.0
        %1562 = vmatprep.subr.mxu0 0.0
        %1563 = vmatpush1.msra.mxu0 0.0
        %1564 = vmatprep.subr.mxu0 0.0
        %1565 = vmatpush1.msra.mxu0 0.0
        %1566 = vmatprep.subr.mxu0 0.0
        %1567 = vmatpush1.msra.mxu0 0.0
        %1568 = vmatprep.subr.mxu0 0.0
        %1569 = vmatpush1.msra.mxu0 0.0
        %1570 = vmatprep.subr.mxu0 0.0
        %1571 = vmatpush1.msra.mxu0 0.0
        %1572 = vmatprep.subr.mxu0 0.0
        %1573 = vmatpush1.msra.mxu0 0.0
        %1574 = vmatprep.mubr.f32.mxu0 0.0
        %1575 = vmatmul.mubr.f32.gmra.mrb[0].mxu0 %v473
        %v1576 = vpop.f32.mrb[0].mxu0
        %v1577 = vadd.f32 0.0, %v1576
        %v1578 = vpop.f32.mrb[0].mxu0
        %1579 = vmatprep.mubr.f32.mxu0 0.0
        %1580 = vmatmul.mubr.f32.gmra.mrb[0].mxu0 %v476
        %v1581 = vpop.f32.mrb[0].mxu0
        %v1582 = vadd.f32 0.0, %v1581
        %v1583 = vpop.f32.mrb[0].mxu0
        %1584 = vmatprep.mubr.f32.mxu0 0.0
        %1585 = vmatmul.mubr.f32.gmra.mrb[0].mxu0 %v479
        %v1586 = vpop.f32.mrb[0].mxu0
        %v1587 = vadd.f32 0.0, %v1586
        %v1588 = vpop.f32.mrb[0].mxu0
        %1589 = vmatprep.mubr.f32.mxu0 0.0
        %1590 = vmatmul.mubr.f32.gmra.mrb[0].mxu0 %v482
        %v1591 = vpop.f32.mrb[0].mxu0
        %v1592 = vadd.f32 0.0, %v1591
        %v1593 = vpop.f32.mrb[0].mxu0
        %1594 = vdwg.mxu0
        %s1595 = scalar_lea.vmem %s157, 192 [#allocation7]
        %1596 = vst.msk [vmem:[%s1595] sm:$0xff] %vm569, %v1577
        %1597 = vst.msk [vmem:[%s1595 + $0x8] sm:$0xff] %vm569, %v1582
        %1598 = vst.msk [vmem:[%s1595 + $0x10] sm:$0xff] %vm569, %v1587
        %1599 = vst.msk [vmem:[%s1595 + $0x18] sm:$0xff] %vm569, %v1592
        %v1601 = vsel %vm390, %v345, 0
        %v1604 = vsel %vm390, %v346, 0
        %1606 = vmatprep.subr.mxu0 0.0
        %1607 = vmatpush1.msra.mxu0 %v364
        %1608 = vmatprep.subr.mxu0 0.0
        %1609 = vmatpush1.msra.mxu0 %v365
        %1610 = vmatprep.subr.mxu0 0.0
        %1611 = vmatpush1.msra.mxu0 0.0
        %1612 = vmatprep.subr.mxu0 0.0
        %1613 = vmatpush1.msra.mxu0 0.0
        %1614 = vmatprep.subr.mxu0 0.0
        %1615 = vmatpush1.msra.mxu0 0.0
        %1616 = vmatprep.subr.mxu0 0.0
        %1617 = vmatpush1.msra.mxu0 0.0
        %1618 = vmatprep.subr.mxu0 0.0
        %1619 = vmatpush1.msra.mxu0 0.0
        %1620 = vmatprep.subr.mxu0 0.0
        %1621 = vmatpush1.msra.mxu0 0.0
        %1622 = vmatprep.subr.mxu0 0.0
        %1623 = vmatpush1.msra.mxu0 0.0
        %1624 = vmatprep.subr.mxu0 0.0
        %1625 = vmatpush1.msra.mxu0 0.0
        %1626 = vmatprep.subr.mxu0 0.0
        %1627 = vmatpush1.msra.mxu0 0.0
        %1628 = vmatprep.subr.mxu0 0.0
        %1629 = vmatpush1.msra.mxu0 0.0
        %1630 = vmatprep.subr.mxu0 0.0
        %1631 = vmatpush1.msra.mxu0 0.0
        %1632 = vmatprep.subr.mxu0 0.0
        %1633 = vmatpush1.msra.mxu0 0.0
        %1634 = vmatprep.subr.mxu0 0.0
        %1635 = vmatpush1.msra.mxu0 0.0
        %1636 = vmatprep.subr.mxu0 0.0
        %1637 = vmatpush1.msra.mxu0 0.0
        %1638 = vmatprep.subr.mxu0 0.0
        %1639 = vmatpush1.msra.mxu0 0.0
        %1640 = vmatprep.subr.mxu0 0.0
        %1641 = vmatpush1.msra.mxu0 0.0
        %1642 = vmatprep.subr.mxu0 0.0
        %1643 = vmatpush1.msra.mxu0 0.0
        %1644 = vmatprep.subr.mxu0 0.0
        %1645 = vmatpush1.msra.mxu0 0.0
        %1646 = vmatprep.subr.mxu0 0.0
        %1647 = vmatpush1.msra.mxu0 0.0
        %1648 = vmatprep.subr.mxu0 0.0
        %1649 = vmatpush1.msra.mxu0 0.0
        %1650 = vmatprep.subr.mxu0 0.0
        %1651 = vmatpush1.msra.mxu0 0.0
        %1652 = vmatprep.subr.mxu0 0.0
        %1653 = vmatpush1.msra.mxu0 0.0
        %1654 = vmatprep.subr.mxu0 0.0
        %1655 = vmatpush1.msra.mxu0 0.0
        %1656 = vmatprep.subr.mxu0 0.0
        %1657 = vmatpush1.msra.mxu0 0.0
        %1658 = vmatprep.subr.mxu0 0.0
        %1659 = vmatpush1.msra.mxu0 0.0
        %1660 = vmatprep.subr.mxu0 0.0
        %1661 = vmatpush1.msra.mxu0 0.0
        %1662 = vmatprep.subr.mxu0 0.0
        %1663 = vmatpush1.msra.mxu0 0.0
        %1664 = vmatprep.subr.mxu0 0.0
        %1665 = vmatpush1.msra.mxu0 0.0
        %1666 = vmatprep.subr.mxu0 0.0
        %1667 = vmatpush1.msra.mxu0 0.0
        %1668 = vmatprep.subr.mxu0 0.0
        %1669 = vmatpush1.msra.mxu0 0.0
        %1670 = vmatprep.mubr.f32.mxu0 0.0
        %1671 = vmatmul.mubr.f32.gmra.mrb[0].mxu0 %v1601
        %v1672 = vpop.f32.mrb[0].mxu0
        %v1673 = vadd.f32 0.0, %v1672
        %v1674 = vpop.f32.mrb[0].mxu0
        %1675 = vmatprep.mubr.f32.mxu0 0.0
        %1676 = vmatmul.mubr.f32.gmra.mrb[0].mxu0 %v1604
        %v1677 = vpop.f32.mrb[0].mxu0
        %v1678 = vadd.f32 0.0, %v1677
        %v1679 = vpop.f32.mrb[0].mxu0
        %1680 = vdwg.mxu0
        %1681 = vmatprep.subr.mxu0 0.0
        %1682 = vmatpush1.msra.mxu0 %v1673
        %1683 = vmatprep.subr.mxu0 0.0
        %1684 = vmatpush1.msra.mxu0 %v1678
        %1685 = vmatprep.subr.mxu0 0.0
        %1686 = vmatpush1.msra.mxu0 0.0
        %1687 = vmatprep.subr.mxu0 0.0
        %1688 = vmatpush1.msra.mxu0 0.0
        %1689 = vmatprep.subr.mxu0 0.0
        %1690 = vmatpush1.msra.mxu0 0.0
        %1691 = vmatprep.subr.mxu0 0.0
        %1692 = vmatpush1.msra.mxu0 0.0
        %1693 = vmatprep.subr.mxu0 0.0
        %1694 = vmatpush1.msra.mxu0 0.0
        %1695 = vmatprep.subr.mxu0 0.0
        %1696 = vmatpush1.msra.mxu0 0.0
        %1697 = vmatprep.subr.mxu0 0.0
        %1698 = vmatpush1.msra.mxu0 0.0
        %1699 = vmatprep.subr.mxu0 0.0
        %1700 = vmatpush1.msra.mxu0 0.0
        %1701 = vmatprep.subr.mxu0 0.0
        %1702 = vmatpush1.msra.mxu0 0.0
        %1703 = vmatprep.subr.mxu0 0.0
        %1704 = vmatpush1.msra.mxu0 0.0
        %1705 = vmatprep.subr.mxu0 0.0
        %1706 = vmatpush1.msra.mxu0 0.0
        %1707 = vmatprep.subr.mxu0 0.0
        %1708 = vmatpush1.msra.mxu0 0.0
        %1709 = vmatprep.subr.mxu0 0.0
        %1710 = vmatpush1.msra.mxu0 0.0
        %1711 = vmatprep.subr.mxu0 0.0
        %1712 = vmatpush1.msra.mxu0 0.0
        %1713 = vmatprep.subr.mxu0 0.0
        %1714 = vmatpush1.msra.mxu0 0.0
        %1715 = vmatprep.subr.mxu0 0.0
        %1716 = vmatpush1.msra.mxu0 0.0
        %1717 = vmatprep.subr.mxu0 0.0
        %1718 = vmatpush1.msra.mxu0 0.0
        %1719 = vmatprep.subr.mxu0 0.0
        %1720 = vmatpush1.msra.mxu0 0.0
        %1721 = vmatprep.subr.mxu0 0.0
        %1722 = vmatpush1.msra.mxu0 0.0
        %1723 = vmatprep.subr.mxu0 0.0
        %1724 = vmatpush1.msra.mxu0 0.0
        %1725 = vmatprep.subr.mxu0 0.0
        %1726 = vmatpush1.msra.mxu0 0.0
        %1727 = vmatprep.subr.mxu0 0.0
        %1728 = vmatpush1.msra.mxu0 0.0
        %1729 = vmatprep.subr.mxu0 0.0
        %1730 = vmatpush1.msra.mxu0 0.0
        %1731 = vmatprep.subr.mxu0 0.0
        %1732 = vmatpush1.msra.mxu0 0.0
        %1733 = vmatprep.subr.mxu0 0.0
        %1734 = vmatpush1.msra.mxu0 0.0
        %1735 = vmatprep.subr.mxu0 0.0
        %1736 = vmatpush1.msra.mxu0 0.0
        %1737 = vmatprep.subr.mxu0 0.0
        %1738 = vmatpush1.msra.mxu0 0.0
        %1739 = vmatprep.subr.mxu0 0.0
        %1740 = vmatpush1.msra.mxu0 0.0
        %1741 = vmatprep.subr.mxu0 0.0
        %1742 = vmatpush1.msra.mxu0 0.0
        %1743 = vmatprep.subr.mxu0 0.0
        %1744 = vmatpush1.msra.mxu0 0.0
        %1745 = vmatprep.mubr.f32.mxu0 0.0
        %1746 = vmatmul.mubr.f32.gmra.mrb[0].mxu0 %v473
        %v1747 = vpop.f32.mrb[0].mxu0
        %v1748 = vadd.f32 0.0, %v1747
        %v1749 = vpop.f32.mrb[0].mxu0
        %1750 = vmatprep.mubr.f32.mxu0 0.0
        %1751 = vmatmul.mubr.f32.gmra.mrb[0].mxu0 %v476
        %v1752 = vpop.f32.mrb[0].mxu0
        %v1753 = vadd.f32 0.0, %v1752
        %v1754 = vpop.f32.mrb[0].mxu0
        %1755 = vmatprep.mubr.f32.mxu0 0.0
        %1756 = vmatmul.mubr.f32.gmra.mrb[0].mxu0 %v479
        %v1757 = vpop.f32.mrb[0].mxu0
        %v1758 = vadd.f32 0.0, %v1757
        %v1759 = vpop.f32.mrb[0].mxu0
        %1760 = vmatprep.mubr.f32.mxu0 0.0
        %1761 = vmatmul.mubr.f32.gmra.mrb[0].mxu0 %v482
        %v1762 = vpop.f32.mrb[0].mxu0
        %v1763 = vadd.f32 0.0, %v1762
        %v1764 = vpop.f32.mrb[0].mxu0
        %1765 = vdwg.mxu0
        %s1766 = scalar_lea.vmem %s157, 224 [#allocation7]
        %1767 = vst.msk [vmem:[%s1766] sm:$0xff] %vm569, %v1748
        %1768 = vst.msk [vmem:[%s1766 + $0x8] sm:$0xff] %vm569, %v1753
        %1769 = vst.msk [vmem:[%s1766 + $0x10] sm:$0xff] %vm569, %v1758
        %1770 = vst.msk [vmem:[%s1766 + $0x18] sm:$0xff] %vm569, %v1763
        %s1771 = sand.u32 %s73, 1
        %s1772 = scalar_lea.sflag [#allocation6], %s1771
        %s1773 = sand.u32 %s73, 1
        %s1774 = smul.addr %s1773, 256
        %s1775 = scalar_lea.vmem [#allocation7], %s1774
        // Predicated region
        $region29: #{tpu_custom_call.1} parent=23 // pred_check
          %p1776 = pneg %p83
        $region30: #{tpu_custom_call.1} parent=23 // pred_check_branch
          %1778 = sbr.rel (%p1776) target = $region32
        $region31: #{tpu_custom_call.1} parent=23 // pred_region
          %s1779 = smul.u32 4, %s28
          %s1781 = ssub.s32 4096, 4096
          %1782 = vsyncadd %s1772, %s1781
          %s1783 = smul.addr %s27, 32
          %s1784 = sadd.s32 %s1779, %s1783
          %s1785 = smul.addr %s1784, 128
          %s1786 = scalar_lea.hbm %s2, %s1785
          %s1787 = sshll.u32 %s1775, 4
          %s1788 = int_to_ptr.vmem [resolvable:$true] %s1787
          %1793 = dma.vmem_to_hbm [thread:$0]  %s1788, 4096, %s1786, %s1772, 128, 128, 8
        $region32: #{tpu_custom_call.1} parent=23 // pred_fallthru
          _
      $region24: #{tpu_custom_call.1} parent=5 // pred_fallthru
        _
      %p1794 = scmp.le.s32.totalorder 2, %s18
      // Predicated region
      $region33: #{tpu_custom_call.1} parent=5 // pred_check
        %p1795 = pneg %p1794
      $region34: #{tpu_custom_call.1} parent=5 // pred_check_branch
        %1797 = sbr.rel (%p1795) target = $region36
      $region35: #{tpu_custom_call.1} parent=5 // pred_region
        %s1798 = ssub.s32 %s18, 2
        // Predicated region
        $region37: #{tpu_custom_call.1} parent=35 // pred_check
          %p1799 = pneg %p89
        $region38: #{tpu_custom_call.1} parent=35 // pred_check_branch
          %1801 = sbr.rel (%p1799) target = $region40
        $region39: #{tpu_custom_call.1} parent=35 // pred_region
          %s1802 = sand.u32 %s74, 1
          %s1803 = scalar_lea.sflag [#allocation6], %s1802
          %s1804 = sand.u32 %s74, 1
          %s1805 = smul.addr %s1804, 256
          %s1806 = scalar_lea.vmem [#allocation7], %s1805
          %1807 = dma.done %s1803, 4096
        $region40: #{tpu_custom_call.1} parent=35 // pred_fallthru
          _
      $region36: #{tpu_custom_call.1} parent=5 // pred_fallthru
        _
    $region6: #{tpu_custom_call.1} parent=1 // loop_footer
      %s22 = sadd.s32 1, %s18
    $region7: #{tpu_custom_call.1} parent=1 // loop_footer_branch
      %17 = sbr.rel target = $region3
    $region8: #{tpu_custom_call.1} parent=1 // loop_exit
      _
    %1808 = vsyncpa [#allocation5], 1
    %s1809 = scalar_lea.sflag [#allocation5], 1
    %1810 = vsyncpa %s1809, 1
    %1811 = vsyncpa [#allocation6], 1
    %s1812 = scalar_lea.sflag [#allocation6], 1
    %1813 = vsyncpa %s1812, 1

</llo_original>
